<compile_context>
chip_gen: v7x
topology: tpu7x:2x2x1
jax: 0.10.0
libtpu: 0.0.40
codegen_flags: <defaults>
</compile_context>

<pallas_src>
import math

import jax
import jax.numpy as jnp
from jax.experimental import pallas as pl
from jax.experimental.pallas import tpu as pltpu

SQRT_2_OVER_PI = math.sqrt(2.0 / math.pi)


def _gelu(x):
    # GPT-2 tanh approximation, identical to the reference GELU module.
    inner = SQRT_2_OVER_PI * (x * (1.0 + 0.044715 * (x * x)))
    return 0.5 * x * (1.0 + jnp.tanh(inner))


# ----------------------------- Pallas kernels --------------------------------

def _ffn_resident_kernel(x_ref, w1_ref, b1_ref, w2_ref, b2_ref, o_ref):
    """Weights-resident path: full W1/W2 live in VMEM, 1-D grid over row tiles.

    x_ref : (TM, D)   bf16   activations for this row tile
    w1_ref: (D, Dh)   bf16   full first-layer weight (constant index_map)
    b1_ref: (1, Dh)   f32
    w2_ref: (Dh, D)   bf16   full second-layer weight (constant index_map)
    b2_ref: (1, D)    f32
    o_ref : (TM, D)   out_dtype
    """
    h = jnp.dot(x_ref[...], w1_ref[...], preferred_element_type=jnp.float32)
    h = _gelu(h + b1_ref[...])                      # f32 bias + GELU (VPU/EUP)
    y = jnp.dot(h.astype(w2_ref.dtype), w2_ref[...],
                preferred_element_type=jnp.float32)
    o_ref[...] = (y + b2_ref[...]).astype(o_ref.dtype)


def _ffn_tiled_kernel(x_ref, w1_ref, b1_ref, w2_ref, b2_ref, o_ref):
    """Large-D fallback: 2-D grid (rows, hidden chunks), o_ref is f32 and
    resident across the hidden (k) axis, so accumulate directly into it.

    x_ref : (TM, D)   bf16
    w1_ref: (D, TK)   bf16   first-layer weight chunk
    b1_ref: (1, TK)   f32
    w2_ref: (TK, D)   bf16   second-layer weight chunk
    b2_ref: (1, D)    f32
    o_ref : (TM, D)   f32    output tile, doubles as the accumulator
    """
    k = pl.program_id(1)

    @pl.when(k == 0)
    def _init():
        o_ref[...] = jnp.broadcast_to(b2_ref[...], o_ref.shape).astype(o_ref.dtype)

    h = jnp.dot(x_ref[...], w1_ref[...], preferred_element_type=jnp.float32)
    h = _gelu(h + b1_ref[...])
    o_ref[...] += jnp.dot(h.astype(w2_ref.dtype), w2_ref[...],
                          preferred_element_type=jnp.float32)


# ----------------------------- Tiling helpers --------------------------------

def _round_up(x, m):
    return ((x + m - 1) // m) * m


def _vmem_cap_bytes():
    """Usable VMEM budget for this chip generation, with headroom."""
    phys = None
    try:
        info = pltpu.get_tpu_info()
        phys = getattr(info, "vmem_capacity_bytes", None)
    except Exception:
        phys = None
    if not phys:
        phys = 64 << 20            # conservative default (v7x per-TC size)
    # ~20% headroom for Mosaic internal scratch; never ask for more than ~100 MiB.
    return min(int(phys * 0.8), 100 << 20)


_TM_CANDIDATES = (1024, 512, 256, 128, 64, 32, 16, 8)
_TK_CANDIDATES = (2048, 1024, 512, 256, 128)


def _pick_resident_tm(n, budget_bytes, per_row_bytes):
    n_cap = max(8, _round_up(n, 8))
    tm_max = max(8, budget_bytes // max(per_row_bytes, 1))
    for c in _TM_CANDIDATES:
        if c <= tm_max and c <= n_cap:
            return c
    return 8


def _pick_fallback_tiles(n, d, dh, cap, op_bytes):
    """Pick (TM, TK) for the weight-streaming path. Larger TM cuts weight HBM
    re-streaming (primary), larger TK cuts k-steps / VMEM RMW (secondary)."""
    n_cap = max(8, _round_up(n, 8))
    misc = (dh + d) * 4 * 2
    for tm in _TM_CANDIDATES:
        if tm > n_cap and tm != 8:
            continue
        for tk in _TK_CANDIDATES:
            if dh % tk:
                continue
            w_bytes = 2 * 2 * d * tk * op_bytes                 # W1+W2 chunks, dbuf
            row_bytes = tm * (2 * d * op_bytes + 2 * d * 4 + tk * 4)
            if w_bytes + row_bytes + misc <= cap:
                return tm, tk
    return 8, (128 if dh % 128 == 0 else dh)


# ----------------------------- Wrapper ---------------------------------------

def feedforward(x, w1, b1, w2, b2, *, operand_dtype=jnp.bfloat16,
                out_dtype=jnp.float32):
    """Fused FeedForward. x: (..., D); w1: (D, 4D); b1: (4D,); w2: (4D, D); b2: (D,).

    Matmul operands run on the MXU in `operand_dtype` (bf16 by default); bias
    add, GELU and accumulation are f32. Pre-cast x/w1/w2 to `operand_dtype`
    once outside hot loops to avoid per-call cast kernels (the astype below is
    then a no-op).
    """
    orig_shape = x.shape
    D = orig_shape[-1]
    Dh = w1.shape[1]
    x2d = x.reshape(-1, D)
    N = x2d.shape[0]

    xo = x2d if x2d.dtype == operand_dtype else x2d.astype(operand_dtype)
    w1o = w1 if w1.dtype == operand_dtype else w1.astype(operand_dtype)
    w2o = w2 if w2.dtype == operand_dtype else w2.astype(operand_dtype)
    b1o = b1.reshape(1, Dh).astype(jnp.float32)
    b2o = b2.reshape(1, D).astype(jnp.float32)

    cap = _vmem_cap_bytes()
    op_b = jnp.dtype(operand_dtype).itemsize
    out_b = jnp.dtype(out_dtype).itemsize

    # ---------------- Path 1: weights resident in VMEM (preferred) -----------
    weights_bytes = 2 * (D * Dh + Dh * D) * op_b        # W1 + W2, double-buffered
    bias_bytes = 2 * (Dh + D) * 4
    fixed = weights_bytes + bias_bytes
    per_row = 2 * D * op_b + 2 * D * out_b + Dh * 4     # x dbuf + out dbuf + f32 hidden

    if fixed + 8 * per_row <= cap:
        TM = _pick_resident_tm(N, cap - fixed, per_row)
        N_pad = _round_up(N, TM)
        rows = N_pad // TM
        # Prefer an even row-tile count so v7x megacore shards the "parallel"
        # axis evenly; with resident weights, a smaller TM costs ~nothing.
        if rows > 1 and rows % 2 == 1 and TM >= 16:
            TM //= 2
            N_pad = _round_up(N, TM)
            rows = N_pad // TM
        if N_pad != N:
            xo = jnp.pad(xo, ((0, N_pad - N), (0, 0)))

        vmem_limit = int(min(max((fixed + TM * per_row) * 1.25 + (2 << 20),
                                 16 << 20), cap))
        out = pl.pallas_call(
            _ffn_resident_kernel,
            out_shape=jax.ShapeDtypeStruct((N_pad, D), out_dtype),
            grid_spec=pltpu.PrefetchScalarGridSpec(
                num_scalar_prefetch=0,
                grid=(rows,),
                in_specs=[
                    pl.BlockSpec((TM, D), lambda i: (i, 0)),    # x rows
                    pl.BlockSpec((D, Dh), lambda i: (0, 0)),    # full W1 (resident)
                    pl.BlockSpec((1, Dh), lambda i: (0, 0)),    # b1
                    pl.BlockSpec((Dh, D), lambda i: (0, 0)),    # full W2 (resident)
                    pl.BlockSpec((1, D), lambda i: (0, 0)),     # b2
                ],
                out_specs=pl.BlockSpec((TM, D), lambda i: (i, 0)),
            ),
            compiler_params=pltpu.CompilerParams(
                dimension_semantics=("parallel",),
                vmem_limit_bytes=vmem_limit,
            ),
        )(xo, w1o, b1o, w2o, b2o)
        out = out[:N]
        return out.reshape(orig_shape[:-1] + (D,))

    # ---------------- Path 2: large-D fallback, stream weight chunks ---------
    TM, TK = _pick_fallback_tiles(N, D, Dh, cap, op_b)
    N_pad = _round_up(N, TM)
    if N_pad != N:
        xo = jnp.pad(xo, ((0, N_pad - N), (0, 0)))
    grid = (N_pad // TM, Dh // TK)

    est = (2 * 2 * D * TK * op_b + TM * (2 * D * op_b + 2 * D * 4 + TK * 4)
           + 2 * (Dh + D) * 4)
    vmem_limit = int(min(max(est * 1.25 + (2 << 20), 16 << 20), cap))

    out = pl.pallas_call(
        _ffn_tiled_kernel,
        out_shape=jax.ShapeDtypeStruct((N_pad, D), jnp.float32),
        grid_spec=pltpu.PrefetchScalarGridSpec(
            num_scalar_prefetch=0,
            grid=grid,
            in_specs=[
                pl.BlockSpec((TM, D), lambda i, k: (i, 0)),     # x rows
                pl.BlockSpec((D, TK), lambda i, k: (0, k)),     # W1 column chunk
                pl.BlockSpec((1, TK), lambda i, k: (0, k)),     # b1 chunk
                pl.BlockSpec((TK, D), lambda i, k: (k, 0)),     # W2 row chunk
                pl.BlockSpec((1, D), lambda i, k: (0, 0)),      # b2
            ],
            out_specs=pl.BlockSpec((TM, D), lambda i, k: (i, 0)),
        ),
        compiler_params=pltpu.CompilerParams(
            dimension_semantics=("parallel", "arbitrary"),
            vmem_limit_bytes=vmem_limit,
        ),
    )(xo, w1o, b1o, w2o, b2o)
    out = out[:N]
    if out.dtype != out_dtype:
        out = out.astype(out_dtype)
    return out.reshape(orig_shape[:-1] + (D,))


# ----------------------------- Main ------------------------------------------

if __name__ == "__main__":
    cfg = {"emb_dim": 128}
    D = cfg["emb_dim"]
    Dh = 4 * D

    key = jax.random.PRNGKey(0)
    kx, k1, k2, k3, k4 = jax.random.split(key, 5)

    B, T = 2, 64
    x = jax.random.normal(kx, (B, T, D), dtype=jnp.float32)

    # nn.Linear-style init (uniform +- 1/sqrt(fan_in)).
    lim1 = 1.0 / math.sqrt(D)
    lim2 = 1.0 / math.sqrt(Dh)
    w1 = jax.random.uniform(k1, (D, Dh), jnp.float32, -lim1, lim1)
    b1 = jax.random.uniform(k2, (Dh,), jnp.float32, -lim1, lim1)
    w2 = jax.random.uniform(k3, (Dh, D), jnp.float32, -lim2, lim2)
    b2 = jax.random.uniform(k4, (D,), jnp.float32, -lim2, lim2)

    # Pre-cast MXU operands once (per perf feedback) so no per-call cast
    # kernels run; biases stay f32.
    w1_op = w1.astype(jnp.bfloat16)
    w2_op = w2.astype(jnp.bfloat16)
    x_op = x.astype(jnp.bfloat16)

    ffn = jax.jit(feedforward)
    y = ffn(x_op, w1_op, b1, w2_op, b2)
    y = jax.block_until_ready(y)

    # Pure-JAX f32 reference (kernel uses bf16 MXU operands -> loose tolerance).
    h_ref = _gelu(x.reshape(-1, D) @ w1 + b1)
    y_ref = (h_ref @ w2 + b2).reshape(B, T, D)

    assert y.shape == (B, T, D)
    assert y.dtype == jnp.float32
    assert bool(jnp.all(jnp.isfinite(y)))
    max_err = float(jnp.max(jnp.abs(y - y_ref)))
    assert max_err < 5e-2, f"max abs error {max_err}"
    print("KERNEL_OK")
</pallas_src>

<mosaic_0001>
module attributes {stable_mosaic.version = 11 : i64} {
  func.func @_ffn_resident_kernel(%arg0: i32, %arg1: memref<128x128xbf16, #tpu.memory_space<vmem>>, %arg2: memref<128x512xbf16, #tpu.memory_space<vmem>>, %arg3: memref<1x512xf32, #tpu.memory_space<vmem>>, %arg4: memref<512x128xbf16, #tpu.memory_space<vmem>>, %arg5: memref<1x128xf32, #tpu.memory_space<vmem>>, %arg6: memref<128x128xf32, #tpu.memory_space<vmem>>) attributes {dimension_semantics = [#tpu.dimension_semantics<parallel>], iteration_bounds = array<i64: 1>, scalar_prefetch = 0 : i64, scratch_operands = 0 : i64, tpu.core_type = #tpu.core_type<tc>, window_params = [{transform_indices = @transform_0, window_bounds = array<i64: 128, 128>}, {pipeline_mode = #tpu.pipeline_mode<synchronous>, transform_indices = @transform_1, window_bounds = array<i64: 128, 512>}, {pipeline_mode = #tpu.pipeline_mode<synchronous>, transform_indices = @transform_2, window_bounds = array<i64: 1, 512>}, {pipeline_mode = #tpu.pipeline_mode<synchronous>, transform_indices = @transform_3, window_bounds = array<i64: 512, 128>}, {pipeline_mode = #tpu.pipeline_mode<synchronous>, transform_indices = @transform_4, window_bounds = array<i64: 1, 128>}, {transform_indices = @transform_5, window_bounds = array<i64: 128, 128>}]} {
    %c0 = arith.constant 0 : index
    %c0_0 = arith.constant 0 : index
    %0 = vector.load %arg1[%c0, %c0_0] : memref<128x128xbf16, #tpu.memory_space<vmem>>, vector<128x128xbf16>
    %c0_1 = arith.constant 0 : index
    %c0_2 = arith.constant 0 : index
    %1 = vector.load %arg2[%c0_1, %c0_2] : memref<128x512xbf16, #tpu.memory_space<vmem>>, vector<128x512xbf16>
    %cst = arith.constant dense<0.000000e+00> : vector<128x512xf32>
    %2 = tpu.matmul %0, %1, %cst {dimension_numbers = #tpu.dot_dimension_numbers<[1], [0], [0], [1], [0, 0, 1, 1], [], []>} : vector<128x128xbf16>, vector<128x512xbf16>, vector<128x512xf32> -> vector<128x512xf32>
    %c0_3 = arith.constant 0 : index
    %c0_4 = arith.constant 0 : index
    %3 = vector.load %arg3[%c0_3, %c0_4] : memref<1x512xf32, #tpu.memory_space<vmem>>, vector<1x512xf32>
    %4 = vector.broadcast %3 : vector<1x512xf32> to vector<128x512xf32>
    %5 = arith.addf %2, %4 : vector<128x512xf32>
    %6 = arith.mulf %5, %5 : vector<128x512xf32>
    %cst_5 = arith.constant 4.471500e-02 : f32
    %7 = vector.broadcast %cst_5 : f32 to vector<128x512xf32>
    %8 = arith.mulf %7, %6 : vector<128x512xf32>
    %cst_6 = arith.constant 1.000000e+00 : f32
    %9 = vector.broadcast %cst_6 : f32 to vector<128x512xf32>
    %10 = arith.addf %9, %8 : vector<128x512xf32>
    %11 = arith.mulf %5, %10 : vector<128x512xf32>
    %cst_7 = arith.constant 0.797884583 : f32
    %12 = vector.broadcast %cst_7 : f32 to vector<128x512xf32>
    %13 = arith.mulf %12, %11 : vector<128x512xf32>
    %cst_8 = arith.constant 5.000000e-01 : f32
    %14 = vector.broadcast %cst_8 : f32 to vector<128x512xf32>
    %15 = arith.mulf %14, %5 : vector<128x512xf32>
    %16 = math.tanh %13 : vector<128x512xf32>
    %cst_9 = arith.constant 1.000000e+00 : f32
    %17 = vector.broadcast %cst_9 : f32 to vector<128x512xf32>
    %18 = arith.addf %17, %16 : vector<128x512xf32>
    %19 = arith.mulf %15, %18 : vector<128x512xf32>
    %20 = arith.truncf %19 : vector<128x512xf32> to vector<128x512xbf16>
    %c0_10 = arith.constant 0 : index
    %c0_11 = arith.constant 0 : index
    %21 = vector.load %arg4[%c0_10, %c0_11] : memref<512x128xbf16, #tpu.memory_space<vmem>>, vector<512x128xbf16>
    %cst_12 = arith.constant dense<0.000000e+00> : vector<128x128xf32>
    %22 = tpu.matmul %20, %21, %cst_12 {dimension_numbers = #tpu.dot_dimension_numbers<[1], [0], [0], [1], [0, 0, 1, 1], [], []>} : vector<128x512xbf16>, vector<512x128xbf16>, vector<128x128xf32> -> vector<128x128xf32>
    %c0_13 = arith.constant 0 : index
    %c0_14 = arith.constant 0 : index
    %23 = vector.load %arg5[%c0_13, %c0_14] : memref<1x128xf32, #tpu.memory_space<vmem>>, vector<1x128xf32>
    %24 = vector.broadcast %23 : vector<1x128xf32> to vector<128x128xf32>
    %25 = arith.addf %22, %24 : vector<128x128xf32>
    %c0_15 = arith.constant 0 : index
    %c0_16 = arith.constant 0 : index
    %26 = vector.load %arg6[%c0_15, %c0_16] : memref<128x128xf32, #tpu.memory_space<vmem>>, vector<128x128xf32>
    tpu.vector_store %arg6[%c0_15, %c0_16], %25 {strides = array<i32>} : memref<128x128xf32, #tpu.memory_space<vmem>>, vector<128x128xf32>,
    return
  }
  func.func @transform_0(%arg0: i32) -> (i32, i32) {
    %c0_i32 = arith.constant 0 : i32
    %c0_i32_0 = arith.constant 0 : i32
    return %arg0, %c0_i32 : i32, i32
  }
  func.func @transform_1(%arg0: i32) -> (i32, i32) {
    %c0_i32 = arith.constant 0 : i32
    %c0_i32_0 = arith.constant 0 : i32
    %c0_i32_1 = arith.constant 0 : i32
    return %c0_i32, %c0_i32_0 : i32, i32
  }
  func.func @transform_2(%arg0: i32) -> (i32, i32) {
    %c0_i32 = arith.constant 0 : i32
    %c0_i32_0 = arith.constant 0 : i32
    %c0_i32_1 = arith.constant 0 : i32
    return %c0_i32, %c0_i32_0 : i32, i32
  }
  func.func @transform_3(%arg0: i32) -> (i32, i32) {
    %c0_i32 = arith.constant 0 : i32
    %c0_i32_0 = arith.constant 0 : i32
    %c0_i32_1 = arith.constant 0 : i32
    return %c0_i32, %c0_i32_0 : i32, i32
  }
  func.func @transform_4(%arg0: i32) -> (i32, i32) {
    %c0_i32 = arith.constant 0 : i32
    %c0_i32_0 = arith.constant 0 : i32
    %c0_i32_1 = arith.constant 0 : i32
    return %c0_i32, %c0_i32_0 : i32, i32
  }
  func.func @transform_5(%arg0: i32) -> (i32, i32) {
    %c0_i32 = arith.constant 0 : i32
    %c0_i32_0 = arith.constant 0 : i32
    return %arg0, %c0_i32 : i32, i32
  }
}

</mosaic_0001>

<llo_original>
// kernel: feedforward.1
$region0: #{feedforward.1}
  #allocation0 [shape = 'u32[]', space=smem, size = 0x4, offset = 0x4, fixed_abs, tag = 'smem constant byte address 0x4 - core index']
  #allocation1 [shape = 'u32[144,128]{1,0:T(1,128)}', space=vmem, size = 0x12000, scoped, tag = 'internal scratch']
  %s0 = inlined_call_operand.hbm [shape: bf16[128,128], index: 0, kind: input, shape index: {}]
  %s1 = inlined_call_operand.hbm [shape: bf16[128,512], index: 1, kind: input, shape index: {}]
  %s2 = inlined_call_operand.vmem [shape: f32[1,512], index: 2, kind: input, shape index: {}]
  %s3 = inlined_call_operand.hbm [shape: bf16[512,128], index: 3, kind: input, shape index: {}]
  %s4 = inlined_call_operand.vmem [shape: f32[1,128], index: 4, kind: input, shape index: {}]
  %s5 = inlined_call_operand.hbm [shape: f32[128,128], index: 5, kind: output, shape index: {}]
  %s6 = sld [smem:[#allocation0]]
  $region42: #{feedforward.1} parent=0
    _
  %s8 = ssub.s32 1, %s6
  %s9 = scalar_select 0, %s8, %s6
  $region1: #{feedforward.1} parent=0
    #allocation2 [shape = 'u8[32768]{0}', space=vmem, size = 0x8000, scoped, tag = 'input window, operand 0, single buffered']
    #allocation3 [shape = 's32[1]{0}', space=sflag, size = 0x4, scoped, tag = 'scoped memory for feedforward.1']
    #allocation4 [shape = 's32[1]{0}', space=sflag, size = 0x4, scoped, tag = 'scoped memory for feedforward.1']
    #allocation5 [shape = 'u8[131072]{0}', space=vmem, size = 0x20000, scoped, tag = 'input window, operand 1, single buffered']
    #allocation6 [shape = 's32[1]{0}', space=sflag, size = 0x4, scoped, tag = 'scoped memory for feedforward.1']
    #allocation7 [shape = 'u8[131072]{0}', space=vmem, size = 0x20000, scoped, tag = 'input window, operand 3, single buffered']
    #allocation8 [shape = 'u8[65536]{0}', space=vmem, size = 0x10000, scoped, tag = 'output window, operand 0, single buffered']
    %10 = vsyncpa [#allocation3], 0
    %11 = vsyncpa [#allocation6], 0
    %12 = vsyncpa [#allocation4], 0
    // Predicated region
    $region2: #{feedforward.1} parent=1 // pred_check
      _
    $region3: #{feedforward.1} parent=1 // pred_check_branch
      %14 = sbr.rel (0) target = $region5
    $region4: #{feedforward.1} parent=1 // pred_region
      %s16 = ssub.s32 1024, 1024
      %17 = vsyncadd [#allocation3], %s16
      %s18 = sshll.u32 [#allocation2], 4
      %s19 = int_to_ptr.vmem [resolvable:$true] %s18
      %24 = dma.hbm_to_vmem [thread:$0]  %s0, 1024, %s19, [#allocation3], 64, 64, 4
    $region5: #{feedforward.1} parent=1 // pred_fallthru
      _
    // Predicated region
    $region6: #{feedforward.1} parent=1 // pred_check
      _
    $region7: #{feedforward.1} parent=1 // pred_check_branch
      %26 = sbr.rel (0) target = $region9
    $region8: #{feedforward.1} parent=1 // pred_region
      %s28 = ssub.s32 4096, 4096
      %29 = vsyncadd [#allocation6], %s28
      %s30 = sshll.u32 [#allocation5], 4
      %s31 = int_to_ptr.vmem [resolvable:$true] %s30
      %36 = dma.hbm_to_vmem [thread:$0]  %s1, 4096, %s31, [#allocation6], 256, 256, 16
    $region9: #{feedforward.1} parent=1 // pred_fallthru
      _
    // Predicated region
    $region10: #{feedforward.1} parent=1 // pred_check
      _
    $region11: #{feedforward.1} parent=1 // pred_check_branch
      %38 = sbr.rel (0) target = $region13
    $region12: #{feedforward.1} parent=1 // pred_region
      _
    $region13: #{feedforward.1} parent=1 // pred_fallthru
      _
    // Predicated region
    $region14: #{feedforward.1} parent=1 // pred_check
      _
    $region15: #{feedforward.1} parent=1 // pred_check_branch
      %40 = sbr.rel (0) target = $region17
    $region16: #{feedforward.1} parent=1 // pred_region
      %s42 = ssub.s32 4096, 4096
      %43 = vsyncadd [#allocation6], %s42
      %s44 = sshll.u32 [#allocation7], 4
      %s45 = int_to_ptr.vmem [resolvable:$true] %s44
      %50 = dma.hbm_to_vmem [thread:$0]  %s3, 4096, %s45, [#allocation6], 64, 64, 4
    $region17: #{feedforward.1} parent=1 // pred_fallthru
      _
    // Predicated region
    $region18: #{feedforward.1} parent=1 // pred_check
      _
    $region19: #{feedforward.1} parent=1 // pred_check_branch
      %52 = sbr.rel (0) target = $region21
    $region20: #{feedforward.1} parent=1 // pred_region
      _
    $region21: #{feedforward.1} parent=1 // pred_fallthru
      _
    // Predicated region
    $region22: #{feedforward.1} parent=1 // pred_check
      _
    $region23: #{feedforward.1} parent=1 // pred_check_branch
      %54 = sbr.rel (0) target = $region25
    $region24: #{feedforward.1} parent=1 // pred_region
      %55 = dma.done [#allocation3], 1024
    $region25: #{feedforward.1} parent=1 // pred_fallthru
      _
    // Predicated region
    $region26: #{feedforward.1} parent=1 // pred_check
      _
    $region27: #{feedforward.1} parent=1 // pred_check_branch
      %57 = sbr.rel (0) target = $region29
    $region28: #{feedforward.1} parent=1 // pred_region
      %58 = dma.done [#allocation6], 4096
    $region29: #{feedforward.1} parent=1 // pred_fallthru
      _
    // Predicated region
    $region30: #{feedforward.1} parent=1 // pred_check
      _
    $region31: #{feedforward.1} parent=1 // pred_check_branch
      %60 = sbr.rel (0) target = $region33
    $region32: #{feedforward.1} parent=1 // pred_region
      %61 = dma.done [#allocation6], 4096
    $region33: #{feedforward.1} parent=1 // pred_fallthru
      _
    %v63 = vld [vmem:[#allocation2] sm:$0xf]
    %v64 = vld [vmem:[#allocation2 + $0x4] sm:$0xf]
    %v65 = vld [vmem:[#allocation2 + $0x8] sm:$0xf]
    %v66 = vld [vmem:[#allocation2 + $0xc] sm:$0xf]
    %v67 = vld [vmem:[#allocation2 + $0x10] sm:$0xf]
    %v68 = vld [vmem:[#allocation2 + $0x14] sm:$0xf]
    %v69 = vld [vmem:[#allocation2 + $0x18] sm:$0xf]
    %v70 = vld [vmem:[#allocation2 + $0x1c] sm:$0xf]
    %v71 = vld [vmem:[#allocation2 + $0x20] sm:$0xf]
    %v72 = vld [vmem:[#allocation2 + $0x24] sm:$0xf]
    %v73 = vld [vmem:[#allocation2 + $0x28] sm:$0xf]
    %v74 = vld [vmem:[#allocation2 + $0x2c] sm:$0xf]
    %v75 = vld [vmem:[#allocation2 + $0x30] sm:$0xf]
    %v76 = vld [vmem:[#allocation2 + $0x34] sm:$0xf]
    %v77 = vld [vmem:[#allocation2 + $0x38] sm:$0xf]
    %v78 = vld [vmem:[#allocation2 + $0x3c] sm:$0xf]
    %v79 = vld [vmem:[#allocation5] sm:$0xff]
    %v80 = vld [vmem:[#allocation5 + $0x8] sm:$0xff]
    %v81 = vld [vmem:[#allocation5 + $0x10] sm:$0xff]
    %v82 = vld [vmem:[#allocation5 + $0x18] sm:$0xff]
    %v83 = vld [vmem:[#allocation5 + $0x20] sm:$0xff]
    %v84 = vld [vmem:[#allocation5 + $0x28] sm:$0xff]
    %v85 = vld [vmem:[#allocation5 + $0x30] sm:$0xff]
    %v86 = vld [vmem:[#allocation5 + $0x38] sm:$0xff]
    %v87 = vld [vmem:[#allocation5 + $0x40] sm:$0xff]
    %v88 = vld [vmem:[#allocation5 + $0x48] sm:$0xff]
    %v89 = vld [vmem:[#allocation5 + $0x50] sm:$0xff]
    %v90 = vld [vmem:[#allocation5 + $0x58] sm:$0xff]
    %v91 = vld [vmem:[#allocation5 + $0x60] sm:$0xff]
    %v92 = vld [vmem:[#allocation5 + $0x68] sm:$0xff]
    %v93 = vld [vmem:[#allocation5 + $0x70] sm:$0xff]
    %v94 = vld [vmem:[#allocation5 + $0x78] sm:$0xff]
    %v95 = vld [vmem:[#allocation5 + $0x80] sm:$0xff]
    %v96 = vld [vmem:[#allocation5 + $0x88] sm:$0xff]
    %v97 = vld [vmem:[#allocation5 + $0x90] sm:$0xff]
    %v98 = vld [vmem:[#allocation5 + $0x98] sm:$0xff]
    %v99 = vld [vmem:[#allocation5 + $0xa0] sm:$0xff]
    %v100 = vld [vmem:[#allocation5 + $0xa8] sm:$0xff]
    %v101 = vld [vmem:[#allocation5 + $0xb0] sm:$0xff]
    %v102 = vld [vmem:[#allocation5 + $0xb8] sm:$0xff]
    %v103 = vld [vmem:[#allocation5 + $0xc0] sm:$0xff]
    %v104 = vld [vmem:[#allocation5 + $0xc8] sm:$0xff]
    %v105 = vld [vmem:[#allocation5 + $0xd0] sm:$0xff]
    %v106 = vld [vmem:[#allocation5 + $0xd8] sm:$0xff]
    %v107 = vld [vmem:[#allocation5 + $0xe0] sm:$0xff]
    %v108 = vld [vmem:[#allocation5 + $0xe8] sm:$0xff]
    %v109 = vld [vmem:[#allocation5 + $0xf0] sm:$0xff]
    %v110 = vld [vmem:[#allocation5 + $0xf8] sm:$0xff]
    %v111 = vld [vmem:[%s2] sm:$0xf]
    %v113 = vlaneseq
    %v114 = vshrl.u32 %v113, 7
    %v115 = vsub.s32 0, %v114
    %v116 = vrot.slane %v111, %v115
    %v117 = vlaneseq
    %v118 = vshrl.u32 %v117, 7
    %v119 = vsub.s32 1, %v118
    %v120 = vrot.slane %v111, %v119
    %v121 = vlaneseq
    %v122 = vshrl.u32 %v121, 7
    %v123 = vsub.s32 2, %v122
    %v124 = vrot.slane %v111, %v123
    %v125 = vlaneseq
    %v126 = vshrl.u32 %v125, 7
    %v127 = vsub.s32 3, %v126
    %v128 = vrot.slane %v111, %v127
    %v149 = vunpack.c.l.b16 %v63
    %v150 = vunpack.c.l.b16 %v64
    %v151 = vunpack.c.l.b16 %v65
    %v152 = vunpack.c.l.b16 %v66
    %v153 = vunpack.c.l.b16 %v67
    %v154 = vunpack.c.l.b16 %v68
    %v155 = vunpack.c.l.b16 %v69
    %v156 = vunpack.c.l.b16 %v70
    %v157 = vunpack.c.l.b16 %v71
    %v158 = vunpack.c.l.b16 %v72
    %v159 = vunpack.c.l.b16 %v73
    %v160 = vunpack.c.l.b16 %v74
    %v161 = vunpack.c.l.b16 %v75
    %v162 = vunpack.c.l.b16 %v76
    %v163 = vunpack.c.l.b16 %v77
    %v164 = vunpack.c.l.b16 %v78
    %v165 = vpack.c.b16 %v150, %v149
    %v166 = vpack.c.b16 %v152, %v151
    %v167 = vpack.c.b16 %v154, %v153
    %v168 = vpack.c.b16 %v156, %v155
    %v169 = vpack.c.b16 %v158, %v157
    %v170 = vpack.c.b16 %v160, %v159
    %v171 = vpack.c.b16 %v162, %v161
    %v172 = vpack.c.b16 %v164, %v163
    %v213 = vunpack.c.l.b16 %v79
    %v214 = vunpack.c.h.b16 %v79
    %v215 = vunpack.c.l.b16 %v80
    %v216 = vunpack.c.h.b16 %v80
    %v217 = vunpack.c.l.b16 %v81
    %v218 = vunpack.c.h.b16 %v81
    %v219 = vunpack.c.l.b16 %v82
    %v220 = vunpack.c.h.b16 %v82
    %v221 = vunpack.c.l.b16 %v83
    %v222 = vunpack.c.h.b16 %v83
    %v223 = vunpack.c.l.b16 %v84
    %v224 = vunpack.c.h.b16 %v84
    %v225 = vunpack.c.l.b16 %v85
    %v226 = vunpack.c.h.b16 %v85
    %v227 = vunpack.c.l.b16 %v86
    %v228 = vunpack.c.h.b16 %v86
    %v229 = vunpack.c.l.b16 %v87
    %v230 = vunpack.c.h.b16 %v87
    %v231 = vunpack.c.l.b16 %v88
    %v232 = vunpack.c.h.b16 %v88
    %v233 = vunpack.c.l.b16 %v89
    %v234 = vunpack.c.h.b16 %v89
    %v235 = vunpack.c.l.b16 %v90
    %v236 = vunpack.c.h.b16 %v90
    %v237 = vunpack.c.l.b16 %v91
    %v238 = vunpack.c.h.b16 %v91
    %v239 = vunpack.c.l.b16 %v92
    %v240 = vunpack.c.h.b16 %v92
    %v241 = vunpack.c.l.b16 %v93
    %v242 = vunpack.c.h.b16 %v93
    %v243 = vunpack.c.l.b16 %v94
    %v244 = vunpack.c.h.b16 %v94
    %v245 = vunpack.c.l.b16 %v95
    %v246 = vunpack.c.h.b16 %v95
    %v247 = vunpack.c.l.b16 %v96
    %v248 = vunpack.c.h.b16 %v96
    %v249 = vunpack.c.l.b16 %v97
    %v250 = vunpack.c.h.b16 %v97
    %v251 = vunpack.c.l.b16 %v98
    %v252 = vunpack.c.h.b16 %v98
    %v253 = vunpack.c.l.b16 %v99
    %v254 = vunpack.c.h.b16 %v99
    %v255 = vunpack.c.l.b16 %v100
    %v256 = vunpack.c.h.b16 %v100
    %v257 = vunpack.c.l.b16 %v101
    %v258 = vunpack.c.h.b16 %v101
    %v259 = vunpack.c.l.b16 %v102
    %v260 = vunpack.c.h.b16 %v102
    %v261 = vunpack.c.l.b16 %v103
    %v262 = vunpack.c.h.b16 %v103
    %v263 = vunpack.c.l.b16 %v104
    %v264 = vunpack.c.h.b16 %v104
    %v265 = vunpack.c.l.b16 %v105
    %v266 = vunpack.c.h.b16 %v105
    %v267 = vunpack.c.l.b16 %v106
    %v268 = vunpack.c.h.b16 %v106
    %v269 = vunpack.c.l.b16 %v107
    %v270 = vunpack.c.h.b16 %v107
    %v271 = vunpack.c.l.b16 %v108
    %v272 = vunpack.c.h.b16 %v108
    %v273 = vunpack.c.l.b16 %v109
    %v274 = vunpack.c.h.b16 %v109
    %v275 = vunpack.c.l.b16 %v110
    %v276 = vunpack.c.h.b16 %v110
    %v277 = vpack.c.b16 %v217, %v213
    %v278 = vpack.c.b16 %v218, %v214
    %v279 = vpack.c.b16 %v219, %v215
    %v280 = vpack.c.b16 %v220, %v216
    %v281 = vpack.c.b16 %v225, %v221
    %v282 = vpack.c.b16 %v226, %v222
    %v283 = vpack.c.b16 %v227, %v223
    %v284 = vpack.c.b16 %v228, %v224
    %v285 = vpack.c.b16 %v233, %v229
    %v286 = vpack.c.b16 %v234, %v230
    %v287 = vpack.c.b16 %v235, %v231
    %v288 = vpack.c.b16 %v236, %v232
    %v289 = vpack.c.b16 %v241, %v237
    %v290 = vpack.c.b16 %v242, %v238
    %v291 = vpack.c.b16 %v243, %v239
    %v292 = vpack.c.b16 %v244, %v240
    %v293 = vpack.c.b16 %v249, %v245
    %v294 = vpack.c.b16 %v250, %v246
    %v295 = vpack.c.b16 %v251, %v247
    %v296 = vpack.c.b16 %v252, %v248
    %v297 = vpack.c.b16 %v257, %v253
    %v298 = vpack.c.b16 %v258, %v254
    %v299 = vpack.c.b16 %v259, %v255
    %v300 = vpack.c.b16 %v260, %v256
    %v301 = vpack.c.b16 %v265, %v261
    %v302 = vpack.c.b16 %v266, %v262
    %v303 = vpack.c.b16 %v267, %v263
    %v304 = vpack.c.b16 %v268, %v264
    %v305 = vpack.c.b16 %v273, %v269
    %v306 = vpack.c.b16 %v274, %v270
    %v307 = vpack.c.b16 %v275, %v271
    %v308 = vpack.c.b16 %v276, %v272
    %341 = vmatprep.subr.bf16.mxu0 %v278
    %342 = vmatpush1.bf16.msra.mxu0 %v277
    %343 = vmatprep.subr.bf16.mxu0 %v282
    %344 = vmatpush1.bf16.msra.mxu0 %v281
    %345 = vmatprep.subr.bf16.mxu0 %v286
    %346 = vmatpush1.bf16.msra.mxu0 %v285
    %347 = vmatprep.subr.bf16.mxu0 %v290
    %348 = vmatpush1.bf16.msra.mxu0 %v289
    %349 = vmatprep.subr.bf16.mxu0 %v294
    %350 = vmatpush1.bf16.msra.mxu0 %v293
    %351 = vmatprep.subr.bf16.mxu0 %v298
    %352 = vmatpush1.bf16.msra.mxu0 %v297
    %353 = vmatprep.subr.bf16.mxu0 %v302
    %354 = vmatpush1.bf16.msra.mxu0 %v301
    %355 = vmatprep.subr.bf16.mxu0 %v306
    %356 = vmatpush1.bf16.msra.mxu0 %v305
    %357 = vmatprep.subr.bf16.mxu0 0
    %358 = vmatpush1.bf16.msra.mxu0 0
    %359 = vmatprep.subr.bf16.mxu0 0
    %360 = vmatpush1.bf16.msra.mxu0 0
    %361 = vmatprep.subr.bf16.mxu0 0
    %362 = vmatpush1.bf16.msra.mxu0 0
    %363 = vmatprep.subr.bf16.mxu0 0
    %364 = vmatpush1.bf16.msra.mxu0 0
    %365 = vmatprep.subr.bf16.mxu0 0
    %366 = vmatpush1.bf16.msra.mxu0 0
    %367 = vmatprep.subr.bf16.mxu0 0
    %368 = vmatpush1.bf16.msra.mxu0 0
    %369 = vmatprep.subr.bf16.mxu0 0
    %370 = vmatpush1.bf16.msra.mxu0 0
    %371 = vmatprep.subr.bf16.mxu0 0
    %372 = vmatpush1.bf16.msra.mxu0 0
    %373 = vmatprep.mubr.bf16.mxu0 0
    %374 = vmatmul.mubr.bf16.gmra.mrb[0].mxu0 %v165
    %v375 = vpop.f32.mrb[0].mxu0
    %v376 = vadd.f32 %v116, %v375
    %v377 = vpop.f32.mrb[0].mxu0
    %v378 = vadd.f32 %v120, %v377
    %v379 = vpop.f32.mrb[0].mxu0
    %v380 = vadd.f32 %v116, %v379
    %v381 = vpop.f32.mrb[0].mxu0
    %v382 = vadd.f32 %v120, %v381
    %383 = vmatprep.mubr.bf16.mxu0 0
    %384 = vmatmul.mubr.bf16.gmra.mrb[0].mxu0 %v166
    %v385 = vpop.f32.mrb[0].mxu0
    %v386 = vadd.f32 %v116, %v385
    %v387 = vpop.f32.mrb[0].mxu0
    %v388 = vadd.f32 %v120, %v387
    %v389 = vpop.f32.mrb[0].mxu0
    %v390 = vadd.f32 %v116, %v389
    %v391 = vpop.f32.mrb[0].mxu0
    %v392 = vadd.f32 %v120, %v391
    %393 = vmatprep.mubr.bf16.mxu0 0
    %394 = vmatmul.mubr.bf16.gmra.mrb[0].mxu0 %v167
    %v395 = vpop.f32.mrb[0].mxu0
    %v396 = vadd.f32 %v116, %v395
    %v397 = vpop.f32.mrb[0].mxu0
    %v398 = vadd.f32 %v120, %v397
    %v399 = vpop.f32.mrb[0].mxu0
    %v400 = vadd.f32 %v116, %v399
    %v401 = vpop.f32.mrb[0].mxu0
    %v402 = vadd.f32 %v120, %v401
    %403 = vmatprep.mubr.bf16.mxu0 0
    %404 = vmatmul.mubr.bf16.gmra.mrb[0].mxu0 %v168
    %v405 = vpop.f32.mrb[0].mxu0
    %v406 = vadd.f32 %v116, %v405
    %v407 = vpop.f32.mrb[0].mxu0
    %v408 = vadd.f32 %v120, %v407
    %v409 = vpop.f32.mrb[0].mxu0
    %v410 = vadd.f32 %v116, %v409
    %v411 = vpop.f32.mrb[0].mxu0
    %v412 = vadd.f32 %v120, %v411
    %413 = vmatprep.mubr.bf16.mxu0 0
    %414 = vmatmul.mubr.bf16.gmra.mrb[0].mxu0 %v169
    %v415 = vpop.f32.mrb[0].mxu0
    %v416 = vadd.f32 %v116, %v415
    %v417 = vpop.f32.mrb[0].mxu0
    %v418 = vadd.f32 %v120, %v417
    %v419 = vpop.f32.mrb[0].mxu0
    %v420 = vadd.f32 %v116, %v419
    %v421 = vpop.f32.mrb[0].mxu0
    %v422 = vadd.f32 %v120, %v421
    %423 = vmatprep.mubr.bf16.mxu0 0
    %424 = vmatmul.mubr.bf16.gmra.mrb[0].mxu0 %v170
    %v425 = vpop.f32.mrb[0].mxu0
    %v426 = vadd.f32 %v116, %v425
    %v427 = vpop.f32.mrb[0].mxu0
    %v428 = vadd.f32 %v120, %v427
    %v429 = vpop.f32.mrb[0].mxu0
    %v430 = vadd.f32 %v116, %v429
    %v431 = vpop.f32.mrb[0].mxu0
    %v432 = vadd.f32 %v120, %v431
    %433 = vmatprep.mubr.bf16.mxu0 0
    %434 = vmatmul.mubr.bf16.gmra.mrb[0].mxu0 %v171
    %v435 = vpop.f32.mrb[0].mxu0
    %v436 = vadd.f32 %v116, %v435
    %v437 = vpop.f32.mrb[0].mxu0
    %v438 = vadd.f32 %v120, %v437
    %v439 = vpop.f32.mrb[0].mxu0
    %v440 = vadd.f32 %v116, %v439
    %v441 = vpop.f32.mrb[0].mxu0
    %v442 = vadd.f32 %v120, %v441
    %443 = vmatprep.mubr.bf16.mxu0 0
    %444 = vmatmul.mubr.bf16.gmra.mrb[0].mxu0 %v172
    %v445 = vpop.f32.mrb[0].mxu0
    %v446 = vadd.f32 %v116, %v445
    %v447 = vpop.f32.mrb[0].mxu0
    %v448 = vadd.f32 %v120, %v447
    %v449 = vpop.f32.mrb[0].mxu0
    %v450 = vadd.f32 %v116, %v449
    %v451 = vpop.f32.mrb[0].mxu0
    %v452 = vadd.f32 %v120, %v451
    %453 = vdwg.mxu0
    %454 = vmatprep.subr.bf16.mxu0 %v280
    %455 = vmatpush1.bf16.msra.mxu0 %v279
    %456 = vmatprep.subr.bf16.mxu0 %v284
    %457 = vmatpush1.bf16.msra.mxu0 %v283
    %458 = vmatprep.subr.bf16.mxu0 %v288
    %459 = vmatpush1.bf16.msra.mxu0 %v287
    %460 = vmatprep.subr.bf16.mxu0 %v292
    %461 = vmatpush1.bf16.msra.mxu0 %v291
    %462 = vmatprep.subr.bf16.mxu0 %v296
    %463 = vmatpush1.bf16.msra.mxu0 %v295
    %464 = vmatprep.subr.bf16.mxu0 %v300
    %465 = vmatpush1.bf16.msra.mxu0 %v299
    %466 = vmatprep.subr.bf16.mxu0 %v304
    %467 = vmatpush1.bf16.msra.mxu0 %v303
    %468 = vmatprep.subr.bf16.mxu0 %v308
    %469 = vmatpush1.bf16.msra.mxu0 %v307
    %470 = vmatprep.subr.bf16.mxu0 0
    %471 = vmatpush1.bf16.msra.mxu0 0
    %472 = vmatprep.subr.bf16.mxu0 0
    %473 = vmatpush1.bf16.msra.mxu0 0
    %474 = vmatprep.subr.bf16.mxu0 0
    %475 = vmatpush1.bf16.msra.mxu0 0
    %476 = vmatprep.subr.bf16.mxu0 0
    %477 = vmatpush1.bf16.msra.mxu0 0
    %478 = vmatprep.subr.bf16.mxu0 0
    %479 = vmatpush1.bf16.msra.mxu0 0
    %480 = vmatprep.subr.bf16.mxu0 0
    %481 = vmatpush1.bf16.msra.mxu0 0
    %482 = vmatprep.subr.bf16.mxu0 0
    %483 = vmatpush1.bf16.msra.mxu0 0
    %484 = vmatprep.subr.bf16.mxu0 0
    %485 = vmatpush1.bf16.msra.mxu0 0
    %486 = vmatprep.mubr.bf16.mxu0 0
    %487 = vmatmul.mubr.bf16.gmra.mrb[0].mxu0 %v165
    %v488 = vpop.f32.mrb[0].mxu0
    %v489 = vadd.f32 %v124, %v488
    %v490 = vpop.f32.mrb[0].mxu0
    %v491 = vadd.f32 %v128, %v490
    %v492 = vpop.f32.mrb[0].mxu0
    %v493 = vadd.f32 %v124, %v492
    %v494 = vpop.f32.mrb[0].mxu0
    %v495 = vadd.f32 %v128, %v494
    %496 = vmatprep.mubr.bf16.mxu0 0
    %497 = vmatmul.mubr.bf16.gmra.mrb[0].mxu0 %v166
    %v498 = vpop.f32.mrb[0].mxu0
    %v499 = vadd.f32 %v124, %v498
    %v500 = vpop.f32.mrb[0].mxu0
    %v501 = vadd.f32 %v128, %v500
    %v502 = vpop.f32.mrb[0].mxu0
    %v503 = vadd.f32 %v124, %v502
    %v504 = vpop.f32.mrb[0].mxu0
    %v505 = vadd.f32 %v128, %v504
    %506 = vmatprep.mubr.bf16.mxu0 0
    %507 = vmatmul.mubr.bf16.gmra.mrb[0].mxu0 %v167
    %v508 = vpop.f32.mrb[0].mxu0
    %v509 = vadd.f32 %v124, %v508
    %v510 = vpop.f32.mrb[0].mxu0
    %v511 = vadd.f32 %v128, %v510
    %v512 = vpop.f32.mrb[0].mxu0
    %v513 = vadd.f32 %v124, %v512
    %v514 = vpop.f32.mrb[0].mxu0
    %v515 = vadd.f32 %v128, %v514
    %516 = vmatprep.mubr.bf16.mxu0 0
    %517 = vmatmul.mubr.bf16.gmra.mrb[0].mxu0 %v168
    %v518 = vpop.f32.mrb[0].mxu0
    %v519 = vadd.f32 %v124, %v518
    %v520 = vpop.f32.mrb[0].mxu0
    %v521 = vadd.f32 %v128, %v520
    %v522 = vpop.f32.mrb[0].mxu0
    %v523 = vadd.f32 %v124, %v522
    %v524 = vpop.f32.mrb[0].mxu0
    %v525 = vadd.f32 %v128, %v524
    %526 = vmatprep.mubr.bf16.mxu0 0
    %527 = vmatmul.mubr.bf16.gmra.mrb[0].mxu0 %v169
    %v528 = vpop.f32.mrb[0].mxu0
    %v529 = vadd.f32 %v124, %v528
    %v530 = vpop.f32.mrb[0].mxu0
    %v531 = vadd.f32 %v128, %v530
    %v532 = vpop.f32.mrb[0].mxu0
    %v533 = vadd.f32 %v124, %v532
    %v534 = vpop.f32.mrb[0].mxu0
    %v535 = vadd.f32 %v128, %v534
    %536 = vmatprep.mubr.bf16.mxu0 0
    %537 = vmatmul.mubr.bf16.gmra.mrb[0].mxu0 %v170
    %v538 = vpop.f32.mrb[0].mxu0
    %v539 = vadd.f32 %v124, %v538
    %v540 = vpop.f32.mrb[0].mxu0
    %v541 = vadd.f32 %v128, %v540
    %v542 = vpop.f32.mrb[0].mxu0
    %v543 = vadd.f32 %v124, %v542
    %v544 = vpop.f32.mrb[0].mxu0
    %v545 = vadd.f32 %v128, %v544
    %546 = vmatprep.mubr.bf16.mxu0 0
    %547 = vmatmul.mubr.bf16.gmra.mrb[0].mxu0 %v171
    %v548 = vpop.f32.mrb[0].mxu0
    %v549 = vadd.f32 %v124, %v548
    %v550 = vpop.f32.mrb[0].mxu0
    %v551 = vadd.f32 %v128, %v550
    %v552 = vpop.f32.mrb[0].mxu0
    %v553 = vadd.f32 %v124, %v552
    %v554 = vpop.f32.mrb[0].mxu0
    %v555 = vadd.f32 %v128, %v554
    %556 = vmatprep.mubr.bf16.mxu0 0
    %557 = vmatmul.mubr.bf16.gmra.mrb[0].mxu0 %v172
    %v558 = vpop.f32.mrb[0].mxu0
    %v559 = vadd.f32 %v124, %v558
    %v560 = vpop.f32.mrb[0].mxu0
    %v561 = vadd.f32 %v128, %v560
    %v562 = vpop.f32.mrb[0].mxu0
    %v563 = vadd.f32 %v124, %v562
    %v564 = vpop.f32.mrb[0].mxu0
    %v565 = vadd.f32 %v128, %v564
    %566 = vdwg.mxu0
    %v567 = vmul.f32 %v376, %v376
    %v568 = vmul.f32 %v378, %v378
    %v569 = vmul.f32 %v489, %v489
    %v570 = vmul.f32 %v491, %v491
    %v571 = vmul.f32 %v380, %v380
    %v572 = vmul.f32 %v382, %v382
    %v573 = vmul.f32 %v493, %v493
    %v574 = vmul.f32 %v495, %v495
    %v575 = vmul.f32 %v386, %v386
    %v576 = vmul.f32 %v388, %v388
    %v577 = vmul.f32 %v499, %v499
    %v578 = vmul.f32 %v501, %v501
    %v579 = vmul.f32 %v390, %v390
    %v580 = vmul.f32 %v392, %v392
    %v581 = vmul.f32 %v503, %v503
    %v582 = vmul.f32 %v505, %v505
    %v583 = vmul.f32 %v396, %v396
    %v584 = vmul.f32 %v398, %v398
    %v585 = vmul.f32 %v509, %v509
    %v586 = vmul.f32 %v511, %v511
    %v587 = vmul.f32 %v400, %v400
    %v588 = vmul.f32 %v402, %v402
    %v589 = vmul.f32 %v513, %v513
    %v590 = vmul.f32 %v515, %v515
    %v591 = vmul.f32 %v406, %v406
    %v592 = vmul.f32 %v408, %v408
    %v593 = vmul.f32 %v519, %v519
    %v594 = vmul.f32 %v521, %v521
    %v595 = vmul.f32 %v410, %v410
    %v596 = vmul.f32 %v412, %v412
    %v597 = vmul.f32 %v523, %v523
    %v598 = vmul.f32 %v525, %v525
    %v599 = vmul.f32 %v416, %v416
    %v600 = vmul.f32 %v418, %v418
    %v601 = vmul.f32 %v529, %v529
    %v602 = vmul.f32 %v531, %v531
    %v603 = vmul.f32 %v420, %v420
    %v604 = vmul.f32 %v422, %v422
    %v605 = vmul.f32 %v533, %v533
    %v606 = vmul.f32 %v535, %v535
    %v607 = vmul.f32 %v426, %v426
    %v608 = vmul.f32 %v428, %v428
    %v609 = vmul.f32 %v539, %v539
    %v610 = vmul.f32 %v541, %v541
    %v611 = vmul.f32 %v430, %v430
    %v612 = vmul.f32 %v432, %v432
    %v613 = vmul.f32 %v543, %v543
    %v614 = vmul.f32 %v545, %v545
    %v615 = vmul.f32 %v436, %v436
    %v616 = vmul.f32 %v438, %v438
    %v617 = vmul.f32 %v549, %v549
    %v618 = vmul.f32 %v551, %v551
    %v619 = vmul.f32 %v440, %v440
    %v620 = vmul.f32 %v442, %v442
    %v621 = vmul.f32 %v553, %v553
    %v622 = vmul.f32 %v555, %v555
    %v623 = vmul.f32 %v446, %v446
    %v624 = vmul.f32 %v448, %v448
    %v625 = vmul.f32 %v559, %v559
    %v626 = vmul.f32 %v561, %v561
    %v627 = vmul.f32 %v450, %v450
    %v628 = vmul.f32 %v452, %v452
    %v629 = vmul.f32 %v563, %v563
    %v630 = vmul.f32 %v565, %v565
    %v631 = vmul.f32 %v567, 0.044715
    %v632 = vmul.f32 %v568, 0.044715
    %v633 = vmul.f32 %v569, 0.044715
    %v634 = vmul.f32 %v570, 0.044715
    %v635 = vmul.f32 %v571, 0.044715
    %v636 = vmul.f32 %v572, 0.044715
    %v637 = vmul.f32 %v573, 0.044715
    %v638 = vmul.f32 %v574, 0.044715
    %v639 = vmul.f32 %v575, 0.044715
    %v640 = vmul.f32 %v576, 0.044715
    %v641 = vmul.f32 %v577, 0.044715
    %v642 = vmul.f32 %v578, 0.044715
    %v643 = vmul.f32 %v579, 0.044715
    %v644 = vmul.f32 %v580, 0.044715
    %v645 = vmul.f32 %v581, 0.044715
    %v646 = vmul.f32 %v582, 0.044715
    %v647 = vmul.f32 %v583, 0.044715
    %v648 = vmul.f32 %v584, 0.044715
    %v649 = vmul.f32 %v585, 0.044715
    %v650 = vmul.f32 %v586, 0.044715
    %v651 = vmul.f32 %v587, 0.044715
    %v652 = vmul.f32 %v588, 0.044715
    %v653 = vmul.f32 %v589, 0.044715
    %v654 = vmul.f32 %v590, 0.044715
    %v655 = vmul.f32 %v591, 0.044715
    %v656 = vmul.f32 %v592, 0.044715
    %v657 = vmul.f32 %v593, 0.044715
    %v658 = vmul.f32 %v594, 0.044715
    %v659 = vmul.f32 %v595, 0.044715
    %v660 = vmul.f32 %v596, 0.044715
    %v661 = vmul.f32 %v597, 0.044715
    %v662 = vmul.f32 %v598, 0.044715
    %v663 = vmul.f32 %v599, 0.044715
    %v664 = vmul.f32 %v600, 0.044715
    %v665 = vmul.f32 %v601, 0.044715
    %v666 = vmul.f32 %v602, 0.044715
    %v667 = vmul.f32 %v603, 0.044715
    %v668 = vmul.f32 %v604, 0.044715
    %v669 = vmul.f32 %v605, 0.044715
    %v670 = vmul.f32 %v606, 0.044715
    %v671 = vmul.f32 %v607, 0.044715
    %v672 = vmul.f32 %v608, 0.044715
    %v673 = vmul.f32 %v609, 0.044715
    %v674 = vmul.f32 %v610, 0.044715
    %v675 = vmul.f32 %v611, 0.044715
    %v676 = vmul.f32 %v612, 0.044715
    %v677 = vmul.f32 %v613, 0.044715
    %v678 = vmul.f32 %v614, 0.044715
    %v679 = vmul.f32 %v615, 0.044715
    %v680 = vmul.f32 %v616, 0.044715
    %v681 = vmul.f32 %v617, 0.044715
    %v682 = vmul.f32 %v618, 0.044715
    %v683 = vmul.f32 %v619, 0.044715
    %v684 = vmul.f32 %v620, 0.044715
    %v685 = vmul.f32 %v621, 0.044715
    %v686 = vmul.f32 %v622, 0.044715
    %v687 = vmul.f32 %v623, 0.044715
    %v688 = vmul.f32 %v624, 0.044715
    %v689 = vmul.f32 %v625, 0.044715
    %v690 = vmul.f32 %v626, 0.044715
    %v691 = vmul.f32 %v627, 0.044715
    %v692 = vmul.f32 %v628, 0.044715
    %v693 = vmul.f32 %v629, 0.044715
    %v694 = vmul.f32 %v630, 0.044715
    %v695 = vadd.f32 %v631, 1.0
    %v696 = vadd.f32 %v632, 1.0
    %v697 = vadd.f32 %v633, 1.0
    %v698 = vadd.f32 %v634, 1.0
    %v699 = vadd.f32 %v635, 1.0
    %v700 = vadd.f32 %v636, 1.0
    %v701 = vadd.f32 %v637, 1.0
    %v702 = vadd.f32 %v638, 1.0
    %v703 = vadd.f32 %v639, 1.0
    %v704 = vadd.f32 %v640, 1.0
    %v705 = vadd.f32 %v641, 1.0
    %v706 = vadd.f32 %v642, 1.0
    %v707 = vadd.f32 %v643, 1.0
    %v708 = vadd.f32 %v644, 1.0
    %v709 = vadd.f32 %v645, 1.0
    %v710 = vadd.f32 %v646, 1.0
    %v711 = vadd.f32 %v647, 1.0
    %v712 = vadd.f32 %v648, 1.0
    %v713 = vadd.f32 %v649, 1.0
    %v714 = vadd.f32 %v650, 1.0
    %v715 = vadd.f32 %v651, 1.0
    %v716 = vadd.f32 %v652, 1.0
    %v717 = vadd.f32 %v653, 1.0
    %v718 = vadd.f32 %v654, 1.0
    %v719 = vadd.f32 %v655, 1.0
    %v720 = vadd.f32 %v656, 1.0
    %v721 = vadd.f32 %v657, 1.0
    %v722 = vadd.f32 %v658, 1.0
    %v723 = vadd.f32 %v659, 1.0
    %v724 = vadd.f32 %v660, 1.0
    %v725 = vadd.f32 %v661, 1.0
    %v726 = vadd.f32 %v662, 1.0
    %v727 = vadd.f32 %v663, 1.0
    %v728 = vadd.f32 %v664, 1.0
    %v729 = vadd.f32 %v665, 1.0
    %v730 = vadd.f32 %v666, 1.0
    %v731 = vadd.f32 %v667, 1.0
    %v732 = vadd.f32 %v668, 1.0
    %v733 = vadd.f32 %v669, 1.0
    %v734 = vadd.f32 %v670, 1.0
    %v735 = vadd.f32 %v671, 1.0
    %v736 = vadd.f32 %v672, 1.0
    %v737 = vadd.f32 %v673, 1.0
    %v738 = vadd.f32 %v674, 1.0
    %v739 = vadd.f32 %v675, 1.0
    %v740 = vadd.f32 %v676, 1.0
    %v741 = vadd.f32 %v677, 1.0
    %v742 = vadd.f32 %v678, 1.0
    %v743 = vadd.f32 %v679, 1.0
    %v744 = vadd.f32 %v680, 1.0
    %v745 = vadd.f32 %v681, 1.0
    %v746 = vadd.f32 %v682, 1.0
    %v747 = vadd.f32 %v683, 1.0
    %v748 = vadd.f32 %v684, 1.0
    %v749 = vadd.f32 %v685, 1.0
    %v750 = vadd.f32 %v686, 1.0
    %v751 = vadd.f32 %v687, 1.0
    %v752 = vadd.f32 %v688, 1.0
    %v753 = vadd.f32 %v689, 1.0
    %v754 = vadd.f32 %v690, 1.0
    %v755 = vadd.f32 %v691, 1.0
    %v756 = vadd.f32 %v692, 1.0
    %v757 = vadd.f32 %v693, 1.0
    %v758 = vadd.f32 %v694, 1.0
    %v759 = vmul.f32 %v376, %v695
    %v760 = vmul.f32 %v378, %v696
    %v761 = vmul.f32 %v489, %v697
    %v762 = vmul.f32 %v491, %v698
    %v763 = vmul.f32 %v380, %v699
    %v764 = vmul.f32 %v382, %v700
    %v765 = vmul.f32 %v493, %v701
    %v766 = vmul.f32 %v495, %v702
    %v767 = vmul.f32 %v386, %v703
    %v768 = vmul.f32 %v388, %v704
    %v769 = vmul.f32 %v499, %v705
    %v770 = vmul.f32 %v501, %v706
    %v771 = vmul.f32 %v390, %v707
    %v772 = vmul.f32 %v392, %v708
    %v773 = vmul.f32 %v503, %v709
    %v774 = vmul.f32 %v505, %v710
    %v775 = vmul.f32 %v396, %v711
    %v776 = vmul.f32 %v398, %v712
    %v777 = vmul.f32 %v509, %v713
    %v778 = vmul.f32 %v511, %v714
    %v779 = vmul.f32 %v400, %v715
    %v780 = vmul.f32 %v402, %v716
    %v781 = vmul.f32 %v513, %v717
    %v782 = vmul.f32 %v515, %v718
    %v783 = vmul.f32 %v406, %v719
    %v784 = vmul.f32 %v408, %v720
    %v785 = vmul.f32 %v519, %v721
    %v786 = vmul.f32 %v521, %v722
    %v787 = vmul.f32 %v410, %v723
    %v788 = vmul.f32 %v412, %v724
    %v789 = vmul.f32 %v523, %v725
    %v790 = vmul.f32 %v525, %v726
    %v791 = vmul.f32 %v416, %v727
    %v792 = vmul.f32 %v418, %v728
    %v793 = vmul.f32 %v529, %v729
    %v794 = vmul.f32 %v531, %v730
    %v795 = vmul.f32 %v420, %v731
    %v796 = vmul.f32 %v422, %v732
    %v797 = vmul.f32 %v533, %v733
    %v798 = vmul.f32 %v535, %v734
    %v799 = vmul.f32 %v426, %v735
    %v800 = vmul.f32 %v428, %v736
    %v801 = vmul.f32 %v539, %v737
    %v802 = vmul.f32 %v541, %v738
    %v803 = vmul.f32 %v430, %v739
    %v804 = vmul.f32 %v432, %v740
    %v805 = vmul.f32 %v543, %v741
    %v806 = vmul.f32 %v545, %v742
    %v807 = vmul.f32 %v436, %v743
    %v808 = vmul.f32 %v438, %v744
    %v809 = vmul.f32 %v549, %v745
    %v810 = vmul.f32 %v551, %v746
    %v811 = vmul.f32 %v440, %v747
    %v812 = vmul.f32 %v442, %v748
    %v813 = vmul.f32 %v553, %v749
    %v814 = vmul.f32 %v555, %v750
    %v815 = vmul.f32 %v446, %v751
    %v816 = vmul.f32 %v448, %v752
    %v817 = vmul.f32 %v559, %v753
    %v818 = vmul.f32 %v561, %v754
    %v819 = vmul.f32 %v450, %v755
    %v820 = vmul.f32 %v452, %v756
    %v821 = vmul.f32 %v563, %v757
    %v822 = vmul.f32 %v565, %v758
    %v823 = vmul.f32 %v759, 0.7978846
    %v824 = vmul.f32 %v760, 0.7978846
    %v825 = vmul.f32 %v761, 0.7978846
    %v826 = vmul.f32 %v762, 0.7978846
    %v827 = vmul.f32 %v763, 0.7978846
    %v828 = vmul.f32 %v764, 0.7978846
    %v829 = vmul.f32 %v765, 0.7978846
    %v830 = vmul.f32 %v766, 0.7978846
    %v831 = vmul.f32 %v767, 0.7978846
    %v832 = vmul.f32 %v768, 0.7978846
    %v833 = vmul.f32 %v769, 0.7978846
    %v834 = vmul.f32 %v770, 0.7978846
    %v835 = vmul.f32 %v771, 0.7978846
    %v836 = vmul.f32 %v772, 0.7978846
    %v837 = vmul.f32 %v773, 0.7978846
    %v838 = vmul.f32 %v774, 0.7978846
    %v839 = vmul.f32 %v775, 0.7978846
    %v840 = vmul.f32 %v776, 0.7978846
    %v841 = vmul.f32 %v777, 0.7978846
    %v842 = vmul.f32 %v778, 0.7978846
    %v843 = vmul.f32 %v779, 0.7978846
    %v844 = vmul.f32 %v780, 0.7978846
    %v845 = vmul.f32 %v781, 0.7978846
    %v846 = vmul.f32 %v782, 0.7978846
    %v847 = vmul.f32 %v783, 0.7978846
    %v848 = vmul.f32 %v784, 0.7978846
    %v849 = vmul.f32 %v785, 0.7978846
    %v850 = vmul.f32 %v786, 0.7978846
    %v851 = vmul.f32 %v787, 0.7978846
    %v852 = vmul.f32 %v788, 0.7978846
    %v853 = vmul.f32 %v789, 0.7978846
    %v854 = vmul.f32 %v790, 0.7978846
    %v855 = vmul.f32 %v791, 0.7978846
    %v856 = vmul.f32 %v792, 0.7978846
    %v857 = vmul.f32 %v793, 0.7978846
    %v858 = vmul.f32 %v794, 0.7978846
    %v859 = vmul.f32 %v795, 0.7978846
    %v860 = vmul.f32 %v796, 0.7978846
    %v861 = vmul.f32 %v797, 0.7978846
    %v862 = vmul.f32 %v798, 0.7978846
    %v863 = vmul.f32 %v799, 0.7978846
    %v864 = vmul.f32 %v800, 0.7978846
    %v865 = vmul.f32 %v801, 0.7978846
    %v866 = vmul.f32 %v802, 0.7978846
    %v867 = vmul.f32 %v803, 0.7978846
    %v868 = vmul.f32 %v804, 0.7978846
    %v869 = vmul.f32 %v805, 0.7978846
    %v870 = vmul.f32 %v806, 0.7978846
    %v871 = vmul.f32 %v807, 0.7978846
    %v872 = vmul.f32 %v808, 0.7978846
    %v873 = vmul.f32 %v809, 0.7978846
    %v874 = vmul.f32 %v810, 0.7978846
    %v875 = vmul.f32 %v811, 0.7978846
    %v876 = vmul.f32 %v812, 0.7978846
    %v877 = vmul.f32 %v813, 0.7978846
    %v878 = vmul.f32 %v814, 0.7978846
    %v879 = vmul.f32 %v815, 0.7978846
    %v880 = vmul.f32 %v816, 0.7978846
    %v881 = vmul.f32 %v817, 0.7978846
    %v882 = vmul.f32 %v818, 0.7978846
    %v883 = vmul.f32 %v819, 0.7978846
    %v884 = vmul.f32 %v820, 0.7978846
    %v885 = vmul.f32 %v821, 0.7978846
    %v886 = vmul.f32 %v822, 0.7978846
    %v887 = vmul.f32 %v376, 0.5
    %v888 = vmul.f32 %v378, 0.5
    %v889 = vmul.f32 %v489, 0.5
    %v890 = vmul.f32 %v491, 0.5
    %v891 = vmul.f32 %v380, 0.5
    %v892 = vmul.f32 %v382, 0.5
    %v893 = vmul.f32 %v493, 0.5
    %v894 = vmul.f32 %v495, 0.5
    %v895 = vmul.f32 %v386, 0.5
    %v896 = vmul.f32 %v388, 0.5
    %v897 = vmul.f32 %v499, 0.5
    %v898 = vmul.f32 %v501, 0.5
    %v899 = vmul.f32 %v390, 0.5
    %v900 = vmul.f32 %v392, 0.5
    %v901 = vmul.f32 %v503, 0.5
    %v902 = vmul.f32 %v505, 0.5
    %v903 = vmul.f32 %v396, 0.5
    %v904 = vmul.f32 %v398, 0.5
    %v905 = vmul.f32 %v509, 0.5
    %v906 = vmul.f32 %v511, 0.5
    %v907 = vmul.f32 %v400, 0.5
    %v908 = vmul.f32 %v402, 0.5
    %v909 = vmul.f32 %v513, 0.5
    %v910 = vmul.f32 %v515, 0.5
    %v911 = vmul.f32 %v406, 0.5
    %v912 = vmul.f32 %v408, 0.5
    %v913 = vmul.f32 %v519, 0.5
    %v914 = vmul.f32 %v521, 0.5
    %v915 = vmul.f32 %v410, 0.5
    %v916 = vmul.f32 %v412, 0.5
    %v917 = vmul.f32 %v523, 0.5
    %v918 = vmul.f32 %v525, 0.5
    %v919 = vmul.f32 %v416, 0.5
    %v920 = vmul.f32 %v418, 0.5
    %v921 = vmul.f32 %v529, 0.5
    %v922 = vmul.f32 %v531, 0.5
    %v923 = vmul.f32 %v420, 0.5
    %v924 = vmul.f32 %v422, 0.5
    %v925 = vmul.f32 %v533, 0.5
    %v926 = vmul.f32 %v535, 0.5
    %v927 = vmul.f32 %v426, 0.5
    %v928 = vmul.f32 %v428, 0.5
    %v929 = vmul.f32 %v539, 0.5
    %v930 = vmul.f32 %v541, 0.5
    %v931 = vmul.f32 %v430, 0.5
    %v932 = vmul.f32 %v432, 0.5
    %v933 = vmul.f32 %v543, 0.5
    %v934 = vmul.f32 %v545, 0.5
    %v935 = vmul.f32 %v436, 0.5
    %v936 = vmul.f32 %v438, 0.5
    %v937 = vmul.f32 %v549, 0.5
    %v938 = vmul.f32 %v551, 0.5
    %v939 = vmul.f32 %v440, 0.5
    %v940 = vmul.f32 %v442, 0.5
    %v941 = vmul.f32 %v553, 0.5
    %v942 = vmul.f32 %v555, 0.5
    %v943 = vmul.f32 %v446, 0.5
    %v944 = vmul.f32 %v448, 0.5
    %v945 = vmul.f32 %v559, 0.5
    %v946 = vmul.f32 %v561, 0.5
    %v947 = vmul.f32 %v450, 0.5
    %v948 = vmul.f32 %v452, 0.5
    %v949 = vmul.f32 %v563, 0.5
    %v950 = vmul.f32 %v565, 0.5
    %v951 = vtanh.pop %v823
    %v952 = vtanh.pop %v824
    %v953 = vtanh.pop %v825
    %v954 = vtanh.pop %v826
    %v955 = vtanh.pop %v827
    %v956 = vtanh.pop %v828
    %v957 = vtanh.pop %v829
    %v958 = vtanh.pop %v830
    %v959 = vtanh.pop %v831
    %v960 = vtanh.pop %v832
    %v961 = vtanh.pop %v833
    %v962 = vtanh.pop %v834
    %v963 = vtanh.pop %v835
    %v964 = vtanh.pop %v836
    %v965 = vtanh.pop %v837
    %v966 = vtanh.pop %v838
    %v967 = vtanh.pop %v839
    %v968 = vtanh.pop %v840
    %v969 = vtanh.pop %v841
    %v970 = vtanh.pop %v842
    %v971 = vtanh.pop %v843
    %v972 = vtanh.pop %v844
    %v973 = vtanh.pop %v845
    %v974 = vtanh.pop %v846
    %v975 = vtanh.pop %v847
    %v976 = vtanh.pop %v848
    %v977 = vtanh.pop %v849
    %v978 = vtanh.pop %v850
    %v979 = vtanh.pop %v851
    %v980 = vtanh.pop %v852
    %v981 = vtanh.pop %v853
    %v982 = vtanh.pop %v854
    %v983 = vtanh.pop %v855
    %v984 = vtanh.pop %v856
    %v985 = vtanh.pop %v857
    %v986 = vtanh.pop %v858
    %v987 = vtanh.pop %v859
    %v988 = vtanh.pop %v860
    %v989 = vtanh.pop %v861
    %v990 = vtanh.pop %v862
    %v991 = vtanh.pop %v863
    %v992 = vtanh.pop %v864
    %v993 = vtanh.pop %v865
    %v994 = vtanh.pop %v866
    %v995 = vtanh.pop %v867
    %v996 = vtanh.pop %v868
    %v997 = vtanh.pop %v869
    %v998 = vtanh.pop %v870
    %v999 = vtanh.pop %v871
    %v1000 = vtanh.pop %v872
    %v1001 = vtanh.pop %v873
    %v1002 = vtanh.pop %v874
    %v1003 = vtanh.pop %v875
    %v1004 = vtanh.pop %v876
    %v1005 = vtanh.pop %v877
    %v1006 = vtanh.pop %v878
    %v1007 = vtanh.pop %v879
    %v1008 = vtanh.pop %v880
    %v1009 = vtanh.pop %v881
    %v1010 = vtanh.pop %v882
    %v1011 = vtanh.pop %v883
    %v1012 = vtanh.pop %v884
    %v1013 = vtanh.pop %v885
    %v1014 = vtanh.pop %v886
    %v1015 = vadd.f32 %v951, 1.0
    %v1016 = vadd.f32 %v952, 1.0
    %v1017 = vadd.f32 %v953, 1.0
    %v1018 = vadd.f32 %v954, 1.0
    %v1019 = vadd.f32 %v955, 1.0
    %v1020 = vadd.f32 %v956, 1.0
    %v1021 = vadd.f32 %v957, 1.0
    %v1022 = vadd.f32 %v958, 1.0
    %v1023 = vadd.f32 %v959, 1.0
    %v1024 = vadd.f32 %v960, 1.0
    %v1025 = vadd.f32 %v961, 1.0
    %v1026 = vadd.f32 %v962, 1.0
    %v1027 = vadd.f32 %v963, 1.0
    %v1028 = vadd.f32 %v964, 1.0
    %v1029 = vadd.f32 %v965, 1.0
    %v1030 = vadd.f32 %v966, 1.0
    %v1031 = vadd.f32 %v967, 1.0
    %v1032 = vadd.f32 %v968, 1.0
    %v1033 = vadd.f32 %v969, 1.0
    %v1034 = vadd.f32 %v970, 1.0
    %v1035 = vadd.f32 %v971, 1.0
    %v1036 = vadd.f32 %v972, 1.0
    %v1037 = vadd.f32 %v973, 1.0
    %v1038 = vadd.f32 %v974, 1.0
    %v1039 = vadd.f32 %v975, 1.0
    %v1040 = vadd.f32 %v976, 1.0
    %v1041 = vadd.f32 %v977, 1.0
    %v1042 = vadd.f32 %v978, 1.0
    %v1043 = vadd.f32 %v979, 1.0
    %v1044 = vadd.f32 %v980, 1.0
    %v1045 = vadd.f32 %v981, 1.0
    %v1046 = vadd.f32 %v982, 1.0
    %v1047 = vadd.f32 %v983, 1.0
    %v1048 = vadd.f32 %v984, 1.0
    %v1049 = vadd.f32 %v985, 1.0
    %v1050 = vadd.f32 %v986, 1.0
    %v1051 = vadd.f32 %v987, 1.0
    %v1052 = vadd.f32 %v988, 1.0
    %v1053 = vadd.f32 %v989, 1.0
    %v1054 = vadd.f32 %v990, 1.0
    %v1055 = vadd.f32 %v991, 1.0
    %v1056 = vadd.f32 %v992, 1.0
    %v1057 = vadd.f32 %v993, 1.0
    %v1058 = vadd.f32 %v994, 1.0
    %v1059 = vadd.f32 %v995, 1.0
    %v1060 = vadd.f32 %v996, 1.0
    %v1061 = vadd.f32 %v997, 1.0
    %v1062 = vadd.f32 %v998, 1.0
    %v1063 = vadd.f32 %v999, 1.0
    %v1064 = vadd.f32 %v1000, 1.0
    %v1065 = vadd.f32 %v1001, 1.0
    %v1066 = vadd.f32 %v1002, 1.0
    %v1067 = vadd.f32 %v1003, 1.0
    %v1068 = vadd.f32 %v1004, 1.0
    %v1069 = vadd.f32 %v1005, 1.0
    %v1070 = vadd.f32 %v1006, 1.0
    %v1071 = vadd.f32 %v1007, 1.0
    %v1072 = vadd.f32 %v1008, 1.0
    %v1073 = vadd.f32 %v1009, 1.0
    %v1074 = vadd.f32 %v1010, 1.0
    %v1075 = vadd.f32 %v1011, 1.0
    %v1076 = vadd.f32 %v1012, 1.0
    %v1077 = vadd.f32 %v1013, 1.0
    %v1078 = vadd.f32 %v1014, 1.0
    %v1079 = vmul.f32 %v887, %v1015
    %v1080 = vmul.f32 %v888, %v1016
    %v1081 = vmul.f32 %v889, %v1017
    %v1082 = vmul.f32 %v890, %v1018
    %v1083 = vmul.f32 %v891, %v1019
    %v1084 = vmul.f32 %v892, %v1020
    %v1085 = vmul.f32 %v893, %v1021
    %v1086 = vmul.f32 %v894, %v1022
    %v1087 = vmul.f32 %v895, %v1023
    %v1088 = vmul.f32 %v896, %v1024
    %v1089 = vmul.f32 %v897, %v1025
    %v1090 = vmul.f32 %v898, %v1026
    %v1091 = vmul.f32 %v899, %v1027
    %v1092 = vmul.f32 %v900, %v1028
    %v1093 = vmul.f32 %v901, %v1029
    %v1094 = vmul.f32 %v902, %v1030
    %v1095 = vmul.f32 %v903, %v1031
    %v1096 = vmul.f32 %v904, %v1032
    %v1097 = vmul.f32 %v905, %v1033
    %v1098 = vmul.f32 %v906, %v1034
    %v1099 = vmul.f32 %v907, %v1035
    %v1100 = vmul.f32 %v908, %v1036
    %v1101 = vmul.f32 %v909, %v1037
    %v1102 = vmul.f32 %v910, %v1038
    %v1103 = vmul.f32 %v911, %v1039
    %v1104 = vmul.f32 %v912, %v1040
    %v1105 = vmul.f32 %v913, %v1041
    %v1106 = vmul.f32 %v914, %v1042
    %v1107 = vmul.f32 %v915, %v1043
    %v1108 = vmul.f32 %v916, %v1044
    %v1109 = vmul.f32 %v917, %v1045
    %v1110 = vmul.f32 %v918, %v1046
    %v1111 = vmul.f32 %v919, %v1047
    %v1112 = vmul.f32 %v920, %v1048
    %v1113 = vmul.f32 %v921, %v1049
    %v1114 = vmul.f32 %v922, %v1050
    %v1115 = vmul.f32 %v923, %v1051
    %v1116 = vmul.f32 %v924, %v1052
    %v1117 = vmul.f32 %v925, %v1053
    %v1118 = vmul.f32 %v926, %v1054
    %v1119 = vmul.f32 %v927, %v1055
    %v1120 = vmul.f32 %v928, %v1056
    %v1121 = vmul.f32 %v929, %v1057
    %v1122 = vmul.f32 %v930, %v1058
    %v1123 = vmul.f32 %v931, %v1059
    %v1124 = vmul.f32 %v932, %v1060
    %v1125 = vmul.f32 %v933, %v1061
    %v1126 = vmul.f32 %v934, %v1062
    %v1127 = vmul.f32 %v935, %v1063
    %v1128 = vmul.f32 %v936, %v1064
    %v1129 = vmul.f32 %v937, %v1065
    %v1130 = vmul.f32 %v938, %v1066
    %v1131 = vmul.f32 %v939, %v1067
    %v1132 = vmul.f32 %v940, %v1068
    %v1133 = vmul.f32 %v941, %v1069
    %v1134 = vmul.f32 %v942, %v1070
    %v1135 = vmul.f32 %v943, %v1071
    %v1136 = vmul.f32 %v944, %v1072
    %v1137 = vmul.f32 %v945, %v1073
    %v1138 = vmul.f32 %v946, %v1074
    %v1139 = vmul.f32 %v947, %v1075
    %v1140 = vmul.f32 %v948, %v1076
    %v1141 = vmul.f32 %v949, %v1077
    %v1142 = vmul.f32 %v950, %v1078
    %v1143 = vpack.c.bf16 %v1083, %v1079
    %v1144 = vpack.c.bf16 %v1084, %v1080
    %v1145 = vpack.c.bf16 %v1085, %v1081
    %v1146 = vpack.c.bf16 %v1086, %v1082
    %v1147 = vpack.c.bf16 %v1091, %v1087
    %v1148 = vpack.c.bf16 %v1092, %v1088
    %v1149 = vpack.c.bf16 %v1093, %v1089
    %v1150 = vpack.c.bf16 %v1094, %v1090
    %v1151 = vpack.c.bf16 %v1099, %v1095
    %v1152 = vpack.c.bf16 %v1100, %v1096
    %v1153 = vpack.c.bf16 %v1101, %v1097
    %v1154 = vpack.c.bf16 %v1102, %v1098
    %v1155 = vpack.c.bf16 %v1107, %v1103
    %v1156 = vpack.c.bf16 %v1108, %v1104
    %v1157 = vpack.c.bf16 %v1109, %v1105
    %v1158 = vpack.c.bf16 %v1110, %v1106
    %v1159 = vpack.c.bf16 %v1115, %v1111
    %v1160 = vpack.c.bf16 %v1116, %v1112
    %v1161 = vpack.c.bf16 %v1117, %v1113
    %v1162 = vpack.c.bf16 %v1118, %v1114
    %v1163 = vpack.c.bf16 %v1123, %v1119
    %v1164 = vpack.c.bf16 %v1124, %v1120
    %v1165 = vpack.c.bf16 %v1125, %v1121
    %v1166 = vpack.c.bf16 %v1126, %v1122
    %v1167 = vpack.c.bf16 %v1131, %v1127
    %v1168 = vpack.c.bf16 %v1132, %v1128
    %v1169 = vpack.c.bf16 %v1133, %v1129
    %v1170 = vpack.c.bf16 %v1134, %v1130
    %v1171 = vpack.c.bf16 %v1139, %v1135
    %v1172 = vpack.c.bf16 %v1140, %v1136
    %v1173 = vpack.c.bf16 %v1141, %v1137
    %v1174 = vpack.c.bf16 %v1142, %v1138
    %v1175 = vld [vmem:[#allocation7] sm:$0xf]
    %v1176 = vld [vmem:[#allocation7 + $0x4] sm:$0xf]
    %v1177 = vld [vmem:[#allocation7 + $0x8] sm:$0xf]
    %v1178 = vld [vmem:[#allocation7 + $0xc] sm:$0xf]
    %v1179 = vld [vmem:[#allocation7 + $0x10] sm:$0xf]
    %v1180 = vld [vmem:[#allocation7 + $0x14] sm:$0xf]
    %v1181 = vld [vmem:[#allocation7 + $0x18] sm:$0xf]
    %v1182 = vld [vmem:[#allocation7 + $0x1c] sm:$0xf]
    %v1183 = vld [vmem:[#allocation7 + $0x20] sm:$0xf]
    %v1184 = vld [vmem:[#allocation7 + $0x24] sm:$0xf]
    %v1185 = vld [vmem:[#allocation7 + $0x28] sm:$0xf]
    %v1186 = vld [vmem:[#allocation7 + $0x2c] sm:$0xf]
    %v1187 = vld [vmem:[#allocation7 + $0x30] sm:$0xf]
    %v1188 = vld [vmem:[#allocation7 + $0x34] sm:$0xf]
    %v1189 = vld [vmem:[#allocation7 + $0x38] sm:$0xf]
    %v1190 = vld [vmem:[#allocation7 + $0x3c] sm:$0xf]
    %v1191 = vld [vmem:[#allocation7 + $0x40] sm:$0xf]
    %v1192 = vld [vmem:[#allocation7 + $0x44] sm:$0xf]
    %v1193 = vld [vmem:[#allocation7 + $0x48] sm:$0xf]
    %v1194 = vld [vmem:[#allocation7 + $0x4c] sm:$0xf]
    %v1195 = vld [vmem:[#allocation7 + $0x50] sm:$0xf]
    %v1196 = vld [vmem:[#allocation7 + $0x54] sm:$0xf]
    %v1197 = vld [vmem:[#allocation7 + $0x58] sm:$0xf]
    %v1198 = vld [vmem:[#allocation7 + $0x5c] sm:$0xf]
    %v1199 = vld [vmem:[#allocation7 + $0x60] sm:$0xf]
    %v1200 = vld [vmem:[#allocation7 + $0x64] sm:$0xf]
    %v1201 = vld [vmem:[#allocation7 + $0x68] sm:$0xf]
    %v1202 = vld [vmem:[#allocation7 + $0x6c] sm:$0xf]
    %v1203 = vld [vmem:[#allocation7 + $0x70] sm:$0xf]
    %v1204 = vld [vmem:[#allocation7 + $0x74] sm:$0xf]
    %v1205 = vld [vmem:[#allocation7 + $0x78] sm:$0xf]
    %v1206 = vld [vmem:[#allocation7 + $0x7c] sm:$0xf]
    %v1207 = vld [vmem:[#allocation7 + $0x80] sm:$0xf]
    %v1208 = vld [vmem:[#allocation7 + $0x84] sm:$0xf]
    %v1209 = vld [vmem:[#allocation7 + $0x88] sm:$0xf]
    %v1210 = vld [vmem:[#allocation7 + $0x8c] sm:$0xf]
    %v1211 = vld [vmem:[#allocation7 + $0x90] sm:$0xf]
    %v1212 = vld [vmem:[#allocation7 + $0x94] sm:$0xf]
    %v1213 = vld [vmem:[#allocation7 + $0x98] sm:$0xf]
    %v1214 = vld [vmem:[#allocation7 + $0x9c] sm:$0xf]
    %v1215 = vld [vmem:[#allocation7 + $0xa0] sm:$0xf]
    %v1216 = vld [vmem:[#allocation7 + $0xa4] sm:$0xf]
    %v1217 = vld [vmem:[#allocation7 + $0xa8] sm:$0xf]
    %v1218 = vld [vmem:[#allocation7 + $0xac] sm:$0xf]
    %v1219 = vld [vmem:[#allocation7 + $0xb0] sm:$0xf]
    %v1220 = vld [vmem:[#allocation7 + $0xb4] sm:$0xf]
    %v1221 = vld [vmem:[#allocation7 + $0xb8] sm:$0xf]
    %v1222 = vld [vmem:[#allocation7 + $0xbc] sm:$0xf]
    %v1223 = vld [vmem:[#allocation7 + $0xc0] sm:$0xf]
    %v1224 = vld [vmem:[#allocation7 + $0xc4] sm:$0xf]
    %v1225 = vld [vmem:[#allocation7 + $0xc8] sm:$0xf]
    %v1226 = vld [vmem:[#allocation7 + $0xcc] sm:$0xf]
    %v1227 = vld [vmem:[#allocation7 + $0xd0] sm:$0xf]
    %v1228 = vld [vmem:[#allocation7 + $0xd4] sm:$0xf]
    %v1229 = vld [vmem:[#allocation7 + $0xd8] sm:$0xf]
    %v1230 = vld [vmem:[#allocation7 + $0xdc] sm:$0xf]
    %v1231 = vld [vmem:[#allocation7 + $0xe0] sm:$0xf]
    %v1232 = vld [vmem:[#allocation7 + $0xe4] sm:$0xf]
    %v1233 = vld [vmem:[#allocation7 + $0xe8] sm:$0xf]
    %v1234 = vld [vmem:[#allocation7 + $0xec] sm:$0xf]
    %v1235 = vld [vmem:[#allocation7 + $0xf0] sm:$0xf]
    %v1236 = vld [vmem:[#allocation7 + $0xf4] sm:$0xf]
    %v1237 = vld [vmem:[#allocation7 + $0xf8] sm:$0xf]
    %v1238 = vld [vmem:[#allocation7 + $0xfc] sm:$0xf]
    %v1239 = vld [vmem:[%s4] sm:$0x1]
    %v1241 = vlaneseq
    %v1242 = vshrl.u32 %v1241, 7
    %v1243 = vsub.s32 0, %v1242
    %v1244 = vrot.slane %v1239, %v1243
    %v1310 = vunpack.c.l.b16 %v1175
    %v1311 = vunpack.c.l.b16 %v1176
    %v1312 = vunpack.c.l.b16 %v1177
    %v1313 = vunpack.c.l.b16 %v1178
    %v1314 = vunpack.c.l.b16 %v1179
    %v1315 = vunpack.c.l.b16 %v1180
    %v1316 = vunpack.c.l.b16 %v1181
    %v1317 = vunpack.c.l.b16 %v1182
    %v1318 = vunpack.c.l.b16 %v1183
    %v1319 = vunpack.c.l.b16 %v1184
    %v1320 = vunpack.c.l.b16 %v1185
    %v1321 = vunpack.c.l.b16 %v1186
    %v1322 = vunpack.c.l.b16 %v1187
    %v1323 = vunpack.c.l.b16 %v1188
    %v1324 = vunpack.c.l.b16 %v1189
    %v1325 = vunpack.c.l.b16 %v1190
    %v1326 = vunpack.c.l.b16 %v1191
    %v1327 = vunpack.c.l.b16 %v1192
    %v1328 = vunpack.c.l.b16 %v1193
    %v1329 = vunpack.c.l.b16 %v1194
    %v1330 = vunpack.c.l.b16 %v1195
    %v1331 = vunpack.c.l.b16 %v1196
    %v1332 = vunpack.c.l.b16 %v1197
    %v1333 = vunpack.c.l.b16 %v1198
    %v1334 = vunpack.c.l.b16 %v1199
    %v1335 = vunpack.c.l.b16 %v1200
    %v1336 = vunpack.c.l.b16 %v1201
    %v1337 = vunpack.c.l.b16 %v1202
    %v1338 = vunpack.c.l.b16 %v1203
    %v1339 = vunpack.c.l.b16 %v1204
    %v1340 = vunpack.c.l.b16 %v1205
    %v1341 = vunpack.c.l.b16 %v1206
    %v1342 = vunpack.c.l.b16 %v1207
    %v1343 = vunpack.c.l.b16 %v1208
    %v1344 = vunpack.c.l.b16 %v1209
    %v1345 = vunpack.c.l.b16 %v1210
    %v1346 = vunpack.c.l.b16 %v1211
    %v1347 = vunpack.c.l.b16 %v1212
    %v1348 = vunpack.c.l.b16 %v1213
    %v1349 = vunpack.c.l.b16 %v1214
    %v1350 = vunpack.c.l.b16 %v1215
    %v1351 = vunpack.c.l.b16 %v1216
    %v1352 = vunpack.c.l.b16 %v1217
    %v1353 = vunpack.c.l.b16 %v1218
    %v1354 = vunpack.c.l.b16 %v1219
    %v1355 = vunpack.c.l.b16 %v1220
    %v1356 = vunpack.c.l.b16 %v1221
    %v1357 = vunpack.c.l.b16 %v1222
    %v1358 = vunpack.c.l.b16 %v1223
    %v1359 = vunpack.c.l.b16 %v1224
    %v1360 = vunpack.c.l.b16 %v1225
    %v1361 = vunpack.c.l.b16 %v1226
    %v1362 = vunpack.c.l.b16 %v1227
    %v1363 = vunpack.c.l.b16 %v1228
    %v1364 = vunpack.c.l.b16 %v1229
    %v1365 = vunpack.c.l.b16 %v1230
    %v1366 = vunpack.c.l.b16 %v1231
    %v1367 = vunpack.c.l.b16 %v1232
    %v1368 = vunpack.c.l.b16 %v1233
    %v1369 = vunpack.c.l.b16 %v1234
    %v1370 = vunpack.c.l.b16 %v1235
    %v1371 = vunpack.c.l.b16 %v1236
    %v1372 = vunpack.c.l.b16 %v1237
    %v1373 = vunpack.c.l.b16 %v1238
    %v1374 = vpack.c.b16 %v1311, %v1310
    %v1375 = vpack.c.b16 %v1313, %v1312
    %v1376 = vpack.c.b16 %v1315, %v1314
    %v1377 = vpack.c.b16 %v1317, %v1316
    %v1378 = vpack.c.b16 %v1319, %v1318
    %v1379 = vpack.c.b16 %v1321, %v1320
    %v1380 = vpack.c.b16 %v1323, %v1322
    %v1381 = vpack.c.b16 %v1325, %v1324
    %v1382 = vpack.c.b16 %v1327, %v1326
    %v1383 = vpack.c.b16 %v1329, %v1328
    %v1384 = vpack.c.b16 %v1331, %v1330
    %v1385 = vpack.c.b16 %v1333, %v1332
    %v1386 = vpack.c.b16 %v1335, %v1334
    %v1387 = vpack.c.b16 %v1337, %v1336
    %v1388 = vpack.c.b16 %v1339, %v1338
    %v1389 = vpack.c.b16 %v1341, %v1340
    %v1390 = vpack.c.b16 %v1343, %v1342
    %v1391 = vpack.c.b16 %v1345, %v1344
    %v1392 = vpack.c.b16 %v1347, %v1346
    %v1393 = vpack.c.b16 %v1349, %v1348
    %v1394 = vpack.c.b16 %v1351, %v1350
    %v1395 = vpack.c.b16 %v1353, %v1352
    %v1396 = vpack.c.b16 %v1355, %v1354
    %v1397 = vpack.c.b16 %v1357, %v1356
    %v1398 = vpack.c.b16 %v1359, %v1358
    %v1399 = vpack.c.b16 %v1361, %v1360
    %v1400 = vpack.c.b16 %v1363, %v1362
    %v1401 = vpack.c.b16 %v1365, %v1364
    %v1402 = vpack.c.b16 %v1367, %v1366
    %v1403 = vpack.c.b16 %v1369, %v1368
    %v1404 = vpack.c.b16 %v1371, %v1370
    %v1405 = vpack.c.b16 %v1373, %v1372
    %1438 = vmatprep.subr.bf16.mxu0 0
    %1439 = vmatpush1.bf16.msra.mxu0 %v1374
    %1440 = vmatprep.subr.bf16.mxu0 0
    %1441 = vmatpush1.bf16.msra.mxu0 %v1375
    %1442 = vmatprep.subr.bf16.mxu0 0
    %1443 = vmatpush1.bf16.msra.mxu0 %v1376
    %1444 = vmatprep.subr.bf16.mxu0 0
    %1445 = vmatpush1.bf16.msra.mxu0 %v1377
    %1446 = vmatprep.subr.bf16.mxu0 0
    %1447 = vmatpush1.bf16.msra.mxu0 %v1378
    %1448 = vmatprep.subr.bf16.mxu0 0
    %1449 = vmatpush1.bf16.msra.mxu0 %v1379
    %1450 = vmatprep.subr.bf16.mxu0 0
    %1451 = vmatpush1.bf16.msra.mxu0 %v1380
    %1452 = vmatprep.subr.bf16.mxu0 0
    %1453 = vmatpush1.bf16.msra.mxu0 %v1381
    %1454 = vmatprep.subr.bf16.mxu0 0
    %1455 = vmatpush1.bf16.msra.mxu0 %v1382
    %1456 = vmatprep.subr.bf16.mxu0 0
    %1457 = vmatpush1.bf16.msra.mxu0 %v1383
    %1458 = vmatprep.subr.bf16.mxu0 0
    %1459 = vmatpush1.bf16.msra.mxu0 %v1384
    %1460 = vmatprep.subr.bf16.mxu0 0
    %1461 = vmatpush1.bf16.msra.mxu0 %v1385
    %1462 = vmatprep.subr.bf16.mxu0 0
    %1463 = vmatpush1.bf16.msra.mxu0 %v1386
    %1464 = vmatprep.subr.bf16.mxu0 0
    %1465 = vmatpush1.bf16.msra.mxu0 %v1387
    %1466 = vmatprep.subr.bf16.mxu0 0
    %1467 = vmatpush1.bf16.msra.mxu0 %v1388
    %1468 = vmatprep.subr.bf16.mxu0 0
    %1469 = vmatpush1.bf16.msra.mxu0 %v1389
    %1470 = vmatprep.mubr.bf16.mxu0 %v1144
    %1471 = vmatmul.mubr.bf16.gmra.mrb[0].mxu0 %v1143
    %v1472 = vpop.f32.mrb[0].mxu0
    %v1473 = vadd.f32 %v1244, %v1472
    %v1474 = vpop.f32.mrb[0].mxu0
    %v1475 = vpop.f32.mrb[0].mxu0
    %v1476 = vadd.f32 %v1244, %v1475
    %v1477 = vpop.f32.mrb[0].mxu0
    %1478 = vmatprep.mubr.bf16.mxu0 %v1148
    %1479 = vmatmul.mubr.bf16.gmra.mrb[0].mxu0 %v1147
    %v1480 = vpop.f32.mrb[0].mxu0
    %v1481 = vadd.f32 %v1244, %v1480
    %v1482 = vpop.f32.mrb[0].mxu0
    %v1483 = vpop.f32.mrb[0].mxu0
    %v1484 = vadd.f32 %v1244, %v1483
    %v1485 = vpop.f32.mrb[0].mxu0
    %1486 = vmatprep.mubr.bf16.mxu0 %v1152
    %1487 = vmatmul.mubr.bf16.gmra.mrb[0].mxu0 %v1151
    %v1488 = vpop.f32.mrb[0].mxu0
    %v1489 = vadd.f32 %v1244, %v1488
    %v1490 = vpop.f32.mrb[0].mxu0
    %v1491 = vpop.f32.mrb[0].mxu0
    %v1492 = vadd.f32 %v1244, %v1491
    %v1493 = vpop.f32.mrb[0].mxu0
    %1494 = vmatprep.mubr.bf16.mxu0 %v1156
    %1495 = vmatmul.mubr.bf16.gmra.mrb[0].mxu0 %v1155
    %v1496 = vpop.f32.mrb[0].mxu0
    %v1497 = vadd.f32 %v1244, %v1496
    %v1498 = vpop.f32.mrb[0].mxu0
    %v1499 = vpop.f32.mrb[0].mxu0
    %v1500 = vadd.f32 %v1244, %v1499
    %v1501 = vpop.f32.mrb[0].mxu0
    %1502 = vmatprep.mubr.bf16.mxu0 %v1160
    %1503 = vmatmul.mubr.bf16.gmra.mrb[0].mxu0 %v1159
    %v1504 = vpop.f32.mrb[0].mxu0
    %v1505 = vadd.f32 %v1244, %v1504
    %v1506 = vpop.f32.mrb[0].mxu0
    %v1507 = vpop.f32.mrb[0].mxu0
    %v1508 = vadd.f32 %v1244, %v1507
    %v1509 = vpop.f32.mrb[0].mxu0
    %1510 = vmatprep.mubr.bf16.mxu0 %v1164
    %1511 = vmatmul.mubr.bf16.gmra.mrb[0].mxu0 %v1163
    %v1512 = vpop.f32.mrb[0].mxu0
    %v1513 = vadd.f32 %v1244, %v1512
    %v1514 = vpop.f32.mrb[0].mxu0
    %v1515 = vpop.f32.mrb[0].mxu0
    %v1516 = vadd.f32 %v1244, %v1515
    %v1517 = vpop.f32.mrb[0].mxu0
    %1518 = vmatprep.mubr.bf16.mxu0 %v1168
    %1519 = vmatmul.mubr.bf16.gmra.mrb[0].mxu0 %v1167
    %v1520 = vpop.f32.mrb[0].mxu0
    %v1521 = vadd.f32 %v1244, %v1520
    %v1522 = vpop.f32.mrb[0].mxu0
    %v1523 = vpop.f32.mrb[0].mxu0
    %v1524 = vadd.f32 %v1244, %v1523
    %v1525 = vpop.f32.mrb[0].mxu0
    %1526 = vmatprep.mubr.bf16.mxu0 %v1172
    %1527 = vmatmul.mubr.bf16.gmra.mrb[0].mxu0 %v1171
    %v1528 = vpop.f32.mrb[0].mxu0
    %v1529 = vadd.f32 %v1244, %v1528
    %v1530 = vpop.f32.mrb[0].mxu0
    %v1531 = vpop.f32.mrb[0].mxu0
    %v1532 = vadd.f32 %v1244, %v1531
    %v1533 = vpop.f32.mrb[0].mxu0
    %1534 = vdwg.mxu0
    %1535 = vmatprep.subr.bf16.mxu0 0
    %1536 = vmatpush1.bf16.msra.mxu0 %v1390
    %1537 = vmatprep.subr.bf16.mxu0 0
    %1538 = vmatpush1.bf16.msra.mxu0 %v1391
    %1539 = vmatprep.subr.bf16.mxu0 0
    %1540 = vmatpush1.bf16.msra.mxu0 %v1392
    %1541 = vmatprep.subr.bf16.mxu0 0
    %1542 = vmatpush1.bf16.msra.mxu0 %v1393
    %1543 = vmatprep.subr.bf16.mxu0 0
    %1544 = vmatpush1.bf16.msra.mxu0 %v1394
    %1545 = vmatprep.subr.bf16.mxu0 0
    %1546 = vmatpush1.bf16.msra.mxu0 %v1395
    %1547 = vmatprep.subr.bf16.mxu0 0
    %1548 = vmatpush1.bf16.msra.mxu0 %v1396
    %1549 = vmatprep.subr.bf16.mxu0 0
    %1550 = vmatpush1.bf16.msra.mxu0 %v1397
    %1551 = vmatprep.subr.bf16.mxu0 0
    %1552 = vmatpush1.bf16.msra.mxu0 %v1398
    %1553 = vmatprep.subr.bf16.mxu0 0
    %1554 = vmatpush1.bf16.msra.mxu0 %v1399
    %1555 = vmatprep.subr.bf16.mxu0 0
    %1556 = vmatpush1.bf16.msra.mxu0 %v1400
    %1557 = vmatprep.subr.bf16.mxu0 0
    %1558 = vmatpush1.bf16.msra.mxu0 %v1401
    %1559 = vmatprep.subr.bf16.mxu0 0
    %1560 = vmatpush1.bf16.msra.mxu0 %v1402
    %1561 = vmatprep.subr.bf16.mxu0 0
    %1562 = vmatpush1.bf16.msra.mxu0 %v1403
    %1563 = vmatprep.subr.bf16.mxu0 0
    %1564 = vmatpush1.bf16.msra.mxu0 %v1404
    %1565 = vmatprep.subr.bf16.mxu0 0
    %1566 = vmatpush1.bf16.msra.mxu0 %v1405
    %1567 = vmatprep.mubr.bf16.mxu0 %v1146
    %1568 = vmatmul.mubr.bf16.gmra.mrb[0].mxu0 %v1145
    %v1569 = vpop.f32.mrb[0].mxu0
    %v1570 = vadd.f32 %v1473, %v1569
    %v1571 = vpop.f32.mrb[0].mxu0
    %v1572 = vpop.f32.mrb[0].mxu0
    %v1573 = vadd.f32 %v1476, %v1572
    %v1574 = vpop.f32.mrb[0].mxu0
    %1575 = vmatprep.mubr.bf16.mxu0 %v1150
    %1576 = vmatmul.mubr.bf16.gmra.mrb[0].mxu0 %v1149
    %v1577 = vpop.f32.mrb[0].mxu0
    %v1578 = vadd.f32 %v1481, %v1577
    %v1579 = vpop.f32.mrb[0].mxu0
    %v1580 = vpop.f32.mrb[0].mxu0
    %v1581 = vadd.f32 %v1484, %v1580
    %v1582 = vpop.f32.mrb[0].mxu0
    %1583 = vmatprep.mubr.bf16.mxu0 %v1154
    %1584 = vmatmul.mubr.bf16.gmra.mrb[0].mxu0 %v1153
    %v1585 = vpop.f32.mrb[0].mxu0
    %v1586 = vadd.f32 %v1489, %v1585
    %v1587 = vpop.f32.mrb[0].mxu0
    %v1588 = vpop.f32.mrb[0].mxu0
    %v1589 = vadd.f32 %v1492, %v1588
    %v1590 = vpop.f32.mrb[0].mxu0
    %1591 = vmatprep.mubr.bf16.mxu0 %v1158
    %1592 = vmatmul.mubr.bf16.gmra.mrb[0].mxu0 %v1157
    %v1593 = vpop.f32.mrb[0].mxu0
    %v1594 = vadd.f32 %v1497, %v1593
    %v1595 = vpop.f32.mrb[0].mxu0
    %v1596 = vpop.f32.mrb[0].mxu0
    %v1597 = vadd.f32 %v1500, %v1596
    %v1598 = vpop.f32.mrb[0].mxu0
    %1599 = vmatprep.mubr.bf16.mxu0 %v1162
    %1600 = vmatmul.mubr.bf16.gmra.mrb[0].mxu0 %v1161
    %v1601 = vpop.f32.mrb[0].mxu0
    %v1602 = vadd.f32 %v1505, %v1601
    %v1603 = vpop.f32.mrb[0].mxu0
    %v1604 = vpop.f32.mrb[0].mxu0
    %v1605 = vadd.f32 %v1508, %v1604
    %v1606 = vpop.f32.mrb[0].mxu0
    %1607 = vmatprep.mubr.bf16.mxu0 %v1166
    %1608 = vmatmul.mubr.bf16.gmra.mrb[0].mxu0 %v1165
    %v1609 = vpop.f32.mrb[0].mxu0
    %v1610 = vadd.f32 %v1513, %v1609
    %v1611 = vpop.f32.mrb[0].mxu0
    %v1612 = vpop.f32.mrb[0].mxu0
    %v1613 = vadd.f32 %v1516, %v1612
    %v1614 = vpop.f32.mrb[0].mxu0
    %1615 = vmatprep.mubr.bf16.mxu0 %v1170
    %1616 = vmatmul.mubr.bf16.gmra.mrb[0].mxu0 %v1169
    %v1617 = vpop.f32.mrb[0].mxu0
    %v1618 = vadd.f32 %v1521, %v1617
    %v1619 = vpop.f32.mrb[0].mxu0
    %v1620 = vpop.f32.mrb[0].mxu0
    %v1621 = vadd.f32 %v1524, %v1620
    %v1622 = vpop.f32.mrb[0].mxu0
    %1623 = vmatprep.mubr.bf16.mxu0 %v1174
    %1624 = vmatmul.mubr.bf16.gmra.mrb[0].mxu0 %v1173
    %v1625 = vpop.f32.mrb[0].mxu0
    %v1626 = vadd.f32 %v1529, %v1625
    %v1627 = vpop.f32.mrb[0].mxu0
    %v1628 = vpop.f32.mrb[0].mxu0
    %v1629 = vadd.f32 %v1532, %v1628
    %v1630 = vpop.f32.mrb[0].mxu0
    %1631 = vdwg.mxu0
    %1632 = vst [vmem:[#allocation8] sm:$0xff] %v1570
    %1633 = vst [vmem:[#allocation8 + $0x8] sm:$0xff] %v1573
    %1634 = vst [vmem:[#allocation8 + $0x10] sm:$0xff] %v1578
    %1635 = vst [vmem:[#allocation8 + $0x18] sm:$0xff] %v1581
    %1636 = vst [vmem:[#allocation8 + $0x20] sm:$0xff] %v1586
    %1637 = vst [vmem:[#allocation8 + $0x28] sm:$0xff] %v1589
    %1638 = vst [vmem:[#allocation8 + $0x30] sm:$0xff] %v1594
    %1639 = vst [vmem:[#allocation8 + $0x38] sm:$0xff] %v1597
    %1640 = vst [vmem:[#allocation8 + $0x40] sm:$0xff] %v1602
    %1641 = vst [vmem:[#allocation8 + $0x48] sm:$0xff] %v1605
    %1642 = vst [vmem:[#allocation8 + $0x50] sm:$0xff] %v1610
    %1643 = vst [vmem:[#allocation8 + $0x58] sm:$0xff] %v1613
    %1644 = vst [vmem:[#allocation8 + $0x60] sm:$0xff] %v1618
    %1645 = vst [vmem:[#allocation8 + $0x68] sm:$0xff] %v1621
    %1646 = vst [vmem:[#allocation8 + $0x70] sm:$0xff] %v1626
    %1647 = vst [vmem:[#allocation8 + $0x78] sm:$0xff] %v1629
    // Predicated region
    $region34: #{feedforward.1} parent=1 // pred_check
      _
    $region35: #{feedforward.1} parent=1 // pred_check_branch
      %1649 = sbr.rel (0) target = $region37
    $region36: #{feedforward.1} parent=1 // pred_region
      %s1651 = ssub.s32 2048, 2048
      %1652 = vsyncadd [#allocation4], %s1651
      %s1653 = sshll.u32 [#allocation8], 4
      %s1654 = int_to_ptr.vmem [resolvable:$true] %s1653
      %1659 = dma.vmem_to_hbm [thread:$0]  %s1654, 2048, %s5, [#allocation4], 128, 128, 8
    $region37: #{feedforward.1} parent=1 // pred_fallthru
      _
    // Predicated region
    $region38: #{feedforward.1} parent=1 // pred_check
      _
    $region39: #{feedforward.1} parent=1 // pred_check_branch
      %1661 = sbr.rel (0) target = $region41
    $region40: #{feedforward.1} parent=1 // pred_region
      %1662 = dma.done [#allocation4], 2048
    $region41: #{feedforward.1} parent=1 // pred_fallthru
      _
    %1663 = vsyncpa [#allocation3], 1
    %1664 = vsyncpa [#allocation6], 1
    %1665 = vsyncpa [#allocation4], 1

</llo_original>
